<compile_context>
chip_gen: v6e
topology: v6e:2x2x1
jax: 0.10.0
libtpu: 0.0.40
codegen_flags: <defaults>
</compile_context>

<pallas_src>
import jax
import jax.numpy as jnp
from jax import lax
from jax.experimental import pallas as pl
from jax.experimental.pallas import tpu as pltpu


def _pick_tile(n, target):
    """Largest tile <= target that divides n and is a multiple of 8; falls back
    to the full extent n (a full-dim block is always a legal block shape)."""
    t = min(target, n)
    while t > 8:
        if n % t == 0 and t % 8 == 0:
            return t
        t //= 2
    return n


# ----------------------------------------------------------------------------
# Kernel 1: fused Q/K/V 1x1-conv projection, channel-major.
# ----------------------------------------------------------------------------
def _qkv_proj_kernel(x_ref, wq_ref, wk_ref, wv_ref, bq_ref, bk_ref, bv_ref,
                     q_ref, k_ref, v_ref):
    # x: (1, C, tm) f32; weights (out_ch, C) bf16; biases (out_ch, 1) f32.
    # x is read from HBM once per tile and reused for all three matmuls.
    x = x_ref[0].astype(jnp.bfloat16)                                    # (C, tm)
    q = jnp.dot(wq_ref[...], x, preferred_element_type=jnp.float32) + bq_ref[...]
    k = jnp.dot(wk_ref[...], x, preferred_element_type=jnp.float32) + bk_ref[...]
    v = jnp.dot(wv_ref[...], x, preferred_element_type=jnp.float32) + bv_ref[...]
    q_ref[0] = q.astype(q_ref.dtype)                                     # (c8, tm)
    k_ref[0] = k.astype(k_ref.dtype)                                     # (c8, tm)
    v_ref[0] = v.astype(v_ref.dtype)                                     # (C, tm)


# ----------------------------------------------------------------------------
# Kernel 2a: attention with per-batch K/V resident in VMEM (small HW).
# ----------------------------------------------------------------------------
def _pam_attn_resident_kernel(q_ref, k_ref, v_ref, x_ref, o_ref):
    # q: (1, c8, tq)  k: (1, c8, HW)  v: (1, C, HW)   bf16, channel-major
    # x: (1, C, tq)   o: (1, C, tq)                    f32, channel-major
    # gamma is already folded into V, so  o = softmax(Q K^T) V + x.
    # S[i, j] = Q_i . K_j : contract the (small) channel dim of both operands.
    s = lax.dot_general(q_ref[0], k_ref[0], (((0,), (0,)), ((), ())),
                        preferred_element_type=jnp.float32)             # (tq, HW)
    m = jnp.max(s, axis=-1, keepdims=True)
    p = jnp.exp(s - m)
    l = jnp.sum(p, axis=-1, keepdims=True)
    p = p * pl.reciprocal(l, approx=True)         # fold softmax denom into P
    # O^T = V^T P^T keeps the output channel-major -> dense tq-wide stores.
    o_t = lax.dot_general(v_ref[0], p.astype(v_ref.dtype),
                          (((1,), (1,)), ((), ())),
                          preferred_element_type=jnp.float32)            # (C, tq)
    o_ref[0] = o_t + x_ref[0]


# ----------------------------------------------------------------------------
# Kernel 2b: flash-style online-softmax attention (kv axis tiled, "arbitrary").
# ----------------------------------------------------------------------------
def _pam_attn_flash_kernel(q_ref, k_ref, v_ref, x_ref, o_ref,
                           m_scr, l_scr, acc_scr):
    ki = pl.program_id(2)

    @pl.when(ki == 0)
    def _():
        m_scr[...] = jnp.full_like(m_scr, -jnp.inf)
        l_scr[...] = jnp.zeros_like(l_scr)
        acc_scr[...] = jnp.zeros_like(acc_scr)

    s = lax.dot_general(q_ref[0], k_ref[0], (((0,), (0,)), ((), ())),
                        preferred_element_type=jnp.float32)             # (tq, tk)
    m_prev = m_scr[...]
    m_new = jnp.maximum(m_prev, jnp.max(s, axis=-1, keepdims=True))
    alpha = jnp.exp(m_prev - m_new)
    p = jnp.exp(s - m_new)
    l_scr[...] = alpha * l_scr[...] + jnp.sum(p, axis=-1, keepdims=True)
    acc_scr[...] = alpha * acc_scr[...] + lax.dot_general(
        p.astype(v_ref.dtype), v_ref[0], (((1,), (1,)), ((), ())),
        preferred_element_type=jnp.float32)                              # (tq, C)
    m_scr[...] = m_new

    @pl.when(ki == pl.num_programs(2) - 1)
    def _():
        out = acc_scr[...] * pl.reciprocal(l_scr[...], approx=True)      # (tq, C)
        # One small transpose per q-block keeps the store channel-major/dense.
        o_ref[0] = out.T + x_ref[0]


# ----------------------------------------------------------------------------
# Wrapper
# ----------------------------------------------------------------------------
def pam_forward(params, x_nchw, *, tm=512, tq=256, tk=256, force_flash=False):
    """PAM_Module.forward. x: (B, C, H, W) f32 -> (B, C, H, W)."""
    B, C, H, W = x_nchw.shape
    HW = H * W
    c8 = max(C // 8, 1)

    tm = _pick_tile(HW, tm)
    tq = _pick_tile(HW, tq)
    tk = _pick_tile(HW, tk)

    # Channel-major activations: NCHW -> (B, C, HW) is a free reshape, so no
    # XLA transpose/pad/slice passes are needed around the kernels.
    x_t = x_nchw.reshape(B, C, HW).astype(jnp.float32)

    gamma = params["gamma"].astype(jnp.float32)
    wq = params["wq"].astype(jnp.bfloat16)                       # (c8, C)
    wk = params["wk"].astype(jnp.bfloat16)                       # (c8, C)
    # gamma * softmax(QK^T) V == softmax(QK^T) (gamma V): fold the scalar into
    # the value projection so the attention kernels need no gamma operand.
    wv = (gamma * params["wv"]).astype(jnp.bfloat16)             # (C, C)
    bq = params["bq"].reshape(c8, 1).astype(jnp.float32)
    bk = params["bk"].reshape(c8, 1).astype(jnp.float32)
    bv = (gamma * params["bv"]).reshape(C, 1).astype(jnp.float32)

    # --- fused Q/K/V projection -------------------------------------------
    q_t, k_t, v_t = pl.pallas_call(
        _qkv_proj_kernel,
        out_shape=(
            jax.ShapeDtypeStruct((B, c8, HW), jnp.bfloat16),
            jax.ShapeDtypeStruct((B, c8, HW), jnp.bfloat16),
            jax.ShapeDtypeStruct((B, C, HW), jnp.bfloat16),
        ),
        grid=(B, HW // tm),
        in_specs=[
            pl.BlockSpec((1, C, tm), lambda b, m: (b, 0, m)),
            pl.BlockSpec((c8, C), lambda b, m: (0, 0)),
            pl.BlockSpec((c8, C), lambda b, m: (0, 0)),
            pl.BlockSpec((C, C), lambda b, m: (0, 0)),
            pl.BlockSpec((c8, 1), lambda b, m: (0, 0)),
            pl.BlockSpec((c8, 1), lambda b, m: (0, 0)),
            pl.BlockSpec((C, 1), lambda b, m: (0, 0)),
        ],
        out_specs=(
            pl.BlockSpec((1, c8, tm), lambda b, m: (b, 0, m)),
            pl.BlockSpec((1, c8, tm), lambda b, m: (b, 0, m)),
            pl.BlockSpec((1, C, tm), lambda b, m: (b, 0, m)),
        ),
        compiler_params=pltpu.CompilerParams(
            dimension_semantics=("parallel", "parallel"),
            vmem_limit_bytes=32 * 1024 * 1024,
        ),
        cost_estimate=pl.CostEstimate(
            flops=2 * B * HW * C * (2 * c8 + C),
            transcendentals=0,
            bytes_accessed=4 * B * C * HW + 2 * B * HW * (2 * c8 + C)
                           + 2 * C * (2 * c8 + C),
        ),
    )(x_t, wq, wk, wv, bq, bk, bv)

    attn_cost = pl.CostEstimate(
        flops=2 * B * HW * HW * (c8 + C),
        transcendentals=B * HW * HW,
        bytes_accessed=2 * B * HW * (2 * c8 + C) + 8 * B * HW * C,
    )

    # Resident path when a whole batch of K/V plus a (tq, HW) score row fits
    # comfortably in VMEM; flash (kv-tiled) path otherwise.
    resident_bytes = HW * (c8 + C) * 2 + tq * HW * 4
    use_resident = (not force_flash) and resident_bytes <= 8 * 1024 * 1024

    if use_resident:
        out_t = pl.pallas_call(
            _pam_attn_resident_kernel,
            out_shape=jax.ShapeDtypeStruct((B, C, HW), jnp.float32),
            grid=(B, HW // tq),
            in_specs=[
                pl.BlockSpec((1, c8, tq), lambda b, i: (b, 0, i)),
                pl.BlockSpec((1, c8, HW), lambda b, i: (b, 0, 0)),
                pl.BlockSpec((1, C, HW), lambda b, i: (b, 0, 0)),
                pl.BlockSpec((1, C, tq), lambda b, i: (b, 0, i)),
            ],
            out_specs=pl.BlockSpec((1, C, tq), lambda b, i: (b, 0, i)),
            compiler_params=pltpu.CompilerParams(
                dimension_semantics=("parallel", "parallel"),
                vmem_limit_bytes=32 * 1024 * 1024,
            ),
            cost_estimate=attn_cost,
        )(q_t, k_t, v_t, x_t)
    else:
        out_t = pl.pallas_call(
            _pam_attn_flash_kernel,
            out_shape=jax.ShapeDtypeStruct((B, C, HW), jnp.float32),
            grid=(B, HW // tq, HW // tk),
            in_specs=[
                pl.BlockSpec((1, c8, tq), lambda b, i, j: (b, 0, i)),
                pl.BlockSpec((1, c8, tk), lambda b, i, j: (b, 0, j)),
                pl.BlockSpec((1, C, tk), lambda b, i, j: (b, 0, j)),
                pl.BlockSpec((1, C, tq), lambda b, i, j: (b, 0, i)),
            ],
            out_specs=pl.BlockSpec((1, C, tq), lambda b, i, j: (b, 0, i)),
            scratch_shapes=[
                pltpu.VMEM((tq, 1), jnp.float32),   # running max
                pltpu.VMEM((tq, 1), jnp.float32),   # running denom
                pltpu.VMEM((tq, C), jnp.float32),   # output accumulator
            ],
            compiler_params=pltpu.CompilerParams(
                dimension_semantics=("parallel", "parallel", "arbitrary"),
                vmem_limit_bytes=32 * 1024 * 1024,
            ),
            cost_estimate=attn_cost,
        )(q_t, k_t, v_t, x_t)

    return out_t.reshape(B, C, H, W)


# ----------------------------------------------------------------------------
# Parameters & pure-JAX reference
# ----------------------------------------------------------------------------
def init_params(key, in_dim):
    c8 = max(in_dim // 8, 1)
    ks = jax.random.split(key, 6)
    s = 0.05
    return {
        # PyTorch Conv2d 1x1 weight orientation: (out_channels, in_channels).
        "wq": jax.random.normal(ks[0], (c8, in_dim), jnp.float32) * s,
        "bq": jax.random.normal(ks[1], (c8,), jnp.float32) * s,
        "wk": jax.random.normal(ks[2], (c8, in_dim), jnp.float32) * s,
        "bk": jax.random.normal(ks[3], (c8,), jnp.float32) * s,
        "wv": jax.random.normal(ks[4], (in_dim, in_dim), jnp.float32) * s,
        "bv": jax.random.normal(ks[5], (in_dim,), jnp.float32) * s,
        # PyTorch initializes gamma to 0 (identity output); use a nonzero value
        # so the attention path actually contributes to the checked output.
        "gamma": jnp.asarray(0.5, jnp.float32),
    }


def pam_reference(params, x_nchw):
    B, C, H, W = x_nchw.shape
    HW = H * W
    x = x_nchw.reshape(B, C, HW).astype(jnp.float32)
    q = jnp.einsum("oc,bcn->bno", params["wq"], x) + params["bq"]          # (B,HW,c8)
    k = jnp.einsum("oc,bcn->bno", params["wk"], x) + params["bk"]          # (B,HW,c8)
    v = jnp.einsum("oc,bcn->bon", params["wv"], x) + params["bv"][:, None]  # (B,C,HW)
    energy = jnp.einsum("bic,bjc->bij", q, k)                              # (B,HW,HW)
    att = jax.nn.softmax(energy, axis=-1)
    out = jnp.einsum("bcj,bij->bci", v, att)                               # (B,C,HW)
    out = params["gamma"] * out + x
    return out.reshape(B, C, H, W)


if __name__ == "__main__":
    key = jax.random.PRNGKey(0)
    kx, kp = jax.random.split(key)

    B, C, H, W = 2, 64, 16, 16           # in_dim=64 -> C//8 = 8, HW = 256
    x = jax.random.normal(kx, (B, C, H, W), jnp.float32)
    params = init_params(kp, C)

    ref = pam_reference(params, x)

    fwd = jax.jit(pam_forward, static_argnames=("tm", "tq", "tk", "force_flash"))

    # Default path (K/V resident in VMEM for this small HW).
    out = jax.block_until_ready(fwd(params, x))
    assert out.shape == (B, C, H, W), out.shape
    assert bool(jnp.all(jnp.isfinite(out)))
    err = float(jnp.max(jnp.abs(out - ref)))
    # bf16 MXU inputs with f32 accumulation: small numeric deviation expected.
    assert err < 5e-2, f"resident path max abs error vs reference: {err}"

    # Also exercise the flash (kv-tiled, online-softmax) path with >1 kv step.
    out_f = jax.block_until_ready(fwd(params, x, tq=128, tk=128, force_flash=True))
    err_f = float(jnp.max(jnp.abs(out_f - ref)))
    assert err_f < 5e-2, f"flash path max abs error vs reference: {err_f}"

    print("KERNEL_OK")
</pallas_src>

<mosaic_0001>
module attributes {stable_mosaic.version = 11 : i64} {
  func.func @_pam_attn_resident_kernel(%arg0: i32, %arg1: i32, %arg2: memref<1x8x256xbf16, #tpu.memory_space<vmem>>, %arg3: memref<1x8x256xbf16, #tpu.memory_space<vmem>>, %arg4: memref<1x64x256xbf16, #tpu.memory_space<vmem>>, %arg5: memref<1x64x256xf32, #tpu.memory_space<vmem>>, %arg6: memref<1x64x256xf32, #tpu.memory_space<vmem>>) attributes {dimension_semantics = [#tpu.dimension_semantics<parallel>, #tpu.dimension_semantics<parallel>], iteration_bounds = array<i64: 2, 1>, scalar_prefetch = 0 : i64, scratch_operands = 0 : i64, tpu.core_type = #tpu.core_type<tc>, window_params = [{transform_indices = @transform_0, window_bounds = array<i64: 1, 8, 256>}, {transform_indices = @transform_1, window_bounds = array<i64: 1, 8, 256>}, {transform_indices = @transform_2, window_bounds = array<i64: 1, 64, 256>}, {transform_indices = @transform_3, window_bounds = array<i64: 1, 64, 256>}, {transform_indices = @transform_4, window_bounds = array<i64: 1, 64, 256>}]} {
    %c0 = arith.constant 0 : index
    %c0_0 = arith.constant 0 : index
    %c0_1 = arith.constant 0 : index
    %0 = vector.load %arg2[%c0, %c0_0, %c0_1] : memref<1x8x256xbf16, #tpu.memory_space<vmem>>, vector<1x8x256xbf16>
    %1 = vector.shape_cast %0 : vector<1x8x256xbf16> to vector<8x256xbf16>
    %c0_2 = arith.constant 0 : index
    %c0_3 = arith.constant 0 : index
    %c0_4 = arith.constant 0 : index
    %2 = vector.load %arg3[%c0_2, %c0_3, %c0_4] : memref<1x8x256xbf16, #tpu.memory_space<vmem>>, vector<1x8x256xbf16>
    %3 = vector.shape_cast %2 : vector<1x8x256xbf16> to vector<8x256xbf16>
    %cst = arith.constant dense<0.000000e+00> : vector<256x256xf32>
    %4 = tpu.matmul %1, %3, %cst {dimension_numbers = #tpu.dot_dimension_numbers<[0], [0], [1], [1], [0, 1, 1, 1], [], []>} : vector<8x256xbf16>, vector<8x256xbf16>, vector<256x256xf32> -> vector<256x256xf32>
    %cst_5 = arith.constant dense<0xFF800000> : vector<256xf32>
    %5 = vector.multi_reduction <maximumf>, %4, %cst_5 [1] : vector<256x256xf32> to vector<256xf32>
    %6 = vector.shape_cast %5 : vector<256xf32> to vector<256x1xf32>
    %7 = vector.broadcast %6 : vector<256x1xf32> to vector<256x256xf32>
    %8 = arith.subf %4, %7 : vector<256x256xf32>
    %9 = math.exp %8 : vector<256x256xf32>
    %cst_6 = arith.constant dense<0.000000e+00> : vector<256xf32>
    %10 = vector.multi_reduction <add>, %9, %cst_6 [1] : vector<256x256xf32> to vector<256xf32>
    %11 = vector.shape_cast %10 : vector<256xf32> to vector<256x1xf32>
    %12 = tpu.reciprocal %11 {approx = true} : vector<256x1xf32> -> vector<256x1xf32>
    %13 = vector.broadcast %12 : vector<256x1xf32> to vector<256x256xf32>
    %14 = arith.mulf %9, %13 : vector<256x256xf32>
    %c0_7 = arith.constant 0 : index
    %c0_8 = arith.constant 0 : index
    %c0_9 = arith.constant 0 : index
    %15 = vector.load %arg4[%c0_7, %c0_8, %c0_9] : memref<1x64x256xbf16, #tpu.memory_space<vmem>>, vector<1x64x256xbf16>
    %16 = vector.shape_cast %15 : vector<1x64x256xbf16> to vector<64x256xbf16>
    %17 = arith.truncf %14 : vector<256x256xf32> to vector<256x256xbf16>
    %cst_10 = arith.constant dense<0.000000e+00> : vector<64x256xf32>
    %18 = tpu.matmul %16, %17, %cst_10 {dimension_numbers = #tpu.dot_dimension_numbers<[1], [1], [0], [0], [0, 0, 1, 0], [], []>} : vector<64x256xbf16>, vector<256x256xbf16>, vector<64x256xf32> -> vector<64x256xf32>
    %c0_11 = arith.constant 0 : index
    %c0_12 = arith.constant 0 : index
    %c0_13 = arith.constant 0 : index
    %19 = vector.load %arg5[%c0_11, %c0_12, %c0_13] : memref<1x64x256xf32, #tpu.memory_space<vmem>>, vector<1x64x256xf32>
    %20 = vector.shape_cast %19 : vector<1x64x256xf32> to vector<64x256xf32>
    %21 = arith.addf %18, %20 : vector<64x256xf32>
    %c0_14 = arith.constant 0 : index
    %c0_15 = arith.constant 0 : index
    %c0_16 = arith.constant 0 : index
    %22 = vector.load %arg6[%c0_14, %c0_15, %c0_16] : memref<1x64x256xf32, #tpu.memory_space<vmem>>, vector<1x64x256xf32>
    %23 = vector.shape_cast %22 : vector<1x64x256xf32> to vector<64x256xf32>
    %24 = vector.shape_cast %21 : vector<64x256xf32> to vector<1x64x256xf32>
    tpu.vector_store %arg6[%c0_14, %c0_15, %c0_16], %24 {strides = array<i32>} : memref<1x64x256xf32, #tpu.memory_space<vmem>>, vector<1x64x256xf32>,
    return
  }
  func.func @transform_0(%arg0: i32, %arg1: i32) -> (i32, i32, i32) {
    %c0_i32 = arith.constant 0 : i32
    %c0_i32_0 = arith.constant 0 : i32
    return %arg0, %c0_i32, %arg1 : i32, i32, i32
  }
  func.func @transform_1(%arg0: i32, %arg1: i32) -> (i32, i32, i32) {
    %c0_i32 = arith.constant 0 : i32
    %c0_i32_0 = arith.constant 0 : i32
    %c0_i32_1 = arith.constant 0 : i32
    return %arg0, %c0_i32, %c0_i32_0 : i32, i32, i32
  }
  func.func @transform_2(%arg0: i32, %arg1: i32) -> (i32, i32, i32) {
    %c0_i32 = arith.constant 0 : i32
    %c0_i32_0 = arith.constant 0 : i32
    %c0_i32_1 = arith.constant 0 : i32
    return %arg0, %c0_i32, %c0_i32_0 : i32, i32, i32
  }
  func.func @transform_3(%arg0: i32, %arg1: i32) -> (i32, i32, i32) {
    %c0_i32 = arith.constant 0 : i32
    %c0_i32_0 = arith.constant 0 : i32
    return %arg0, %c0_i32, %arg1 : i32, i32, i32
  }
  func.func @transform_4(%arg0: i32, %arg1: i32) -> (i32, i32, i32) {
    %c0_i32 = arith.constant 0 : i32
    %c0_i32_0 = arith.constant 0 : i32
    return %arg0, %c0_i32, %arg1 : i32, i32, i32
  }
}

module attributes {stable_mosaic.version = 11 : i64} {
  func.func @_qkv_proj_kernel(%arg0: i32, %arg1: i32, %arg2: memref<1x64x256xf32, #tpu.memory_space<vmem>>, %arg3: memref<8x64xbf16, #tpu.memory_space<vmem>>, %arg4: memref<8x64xbf16, #tpu.memory_space<vmem>>, %arg5: memref<64x64xbf16, #tpu.memory_space<vmem>>, %arg6: memref<8x1xf32, #tpu.memory_space<vmem>>, %arg7: memref<8x1xf32, #tpu.memory_space<vmem>>, %arg8: memref<64x1xf32, #tpu.memory_space<vmem>>, %arg9: memref<1x8x256xbf16, #tpu.memory_space<vmem>>, %arg10: memref<1x8x256xbf16, #tpu.memory_space<vmem>>, %arg11: memref<1x64x256xbf16, #tpu.memory_space<vmem>>) attributes {dimension_semantics = [#tpu.dimension_semantics<parallel>, #tpu.dimension_semantics<parallel>], iteration_bounds = array<i64: 2, 1>, scalar_prefetch = 0 : i64, scratch_operands = 0 : i64, tpu.core_type = #tpu.core_type<tc>, window_params = [{transform_indices = @transform_0, window_bounds = array<i64: 1, 64, 256>}, {pipeline_mode = #tpu.pipeline_mode<synchronous>, transform_indices = @transform_1, window_bounds = array<i64: 8, 64>}, {pipeline_mode = #tpu.pipeline_mode<synchronous>, transform_indices = @transform_2, window_bounds = array<i64: 8, 64>}, {pipeline_mode = #tpu.pipeline_mode<synchronous>, transform_indices = @transform_3, window_bounds = array<i64: 64, 64>}, {pipeline_mode = #tpu.pipeline_mode<synchronous>, transform_indices = @transform_4, window_bounds = array<i64: 8, 1>}, {pipeline_mode = #tpu.pipeline_mode<synchronous>, transform_indices = @transform_5, window_bounds = array<i64: 8, 1>}, {pipeline_mode = #tpu.pipeline_mode<synchronous>, transform_indices = @transform_6, window_bounds = array<i64: 64, 1>}, {transform_indices = @transform_7, window_bounds = array<i64: 1, 8, 256>}, {transform_indices = @transform_8, window_bounds = array<i64: 1, 8, 256>}, {transform_indices = @transform_9, window_bounds = array<i64: 1, 64, 256>}]} {
    %c0 = arith.constant 0 : index
    %c0_0 = arith.constant 0 : index
    %c0_1 = arith.constant 0 : index
    %0 = vector.load %arg2[%c0, %c0_0, %c0_1] : memref<1x64x256xf32, #tpu.memory_space<vmem>>, vector<1x64x256xf32>
    %1 = vector.shape_cast %0 : vector<1x64x256xf32> to vector<64x256xf32>
    %2 = arith.truncf %1 : vector<64x256xf32> to vector<64x256xbf16>
    %c0_2 = arith.constant 0 : index
    %c0_3 = arith.constant 0 : index
    %3 = vector.load %arg3[%c0_2, %c0_3] : memref<8x64xbf16, #tpu.memory_space<vmem>>, vector<8x64xbf16>
    %cst = arith.constant dense<0.000000e+00> : vector<8x256xf32>
    %4 = tpu.matmul %3, %2, %cst {dimension_numbers = #tpu.dot_dimension_numbers<[1], [0], [0], [1], [0, 0, 1, 1], [], []>} : vector<8x64xbf16>, vector<64x256xbf16>, vector<8x256xf32> -> vector<8x256xf32>
    %c0_4 = arith.constant 0 : index
    %c0_5 = arith.constant 0 : index
    %5 = vector.load %arg6[%c0_4, %c0_5] : memref<8x1xf32, #tpu.memory_space<vmem>>, vector<8x1xf32>
    %6 = vector.broadcast %5 : vector<8x1xf32> to vector<8x256xf32>
    %7 = arith.addf %4, %6 : vector<8x256xf32>
    %c0_6 = arith.constant 0 : index
    %c0_7 = arith.constant 0 : index
    %8 = vector.load %arg4[%c0_6, %c0_7] : memref<8x64xbf16, #tpu.memory_space<vmem>>, vector<8x64xbf16>
    %cst_8 = arith.constant dense<0.000000e+00> : vector<8x256xf32>
    %9 = tpu.matmul %8, %2, %cst_8 {dimension_numbers = #tpu.dot_dimension_numbers<[1], [0], [0], [1], [0, 0, 1, 1], [], []>} : vector<8x64xbf16>, vector<64x256xbf16>, vector<8x256xf32> -> vector<8x256xf32>
    %c0_9 = arith.constant 0 : index
    %c0_10 = arith.constant 0 : index
    %10 = vector.load %arg7[%c0_9, %c0_10] : memref<8x1xf32, #tpu.memory_space<vmem>>, vector<8x1xf32>
    %11 = vector.broadcast %10 : vector<8x1xf32> to vector<8x256xf32>
    %12 = arith.addf %9, %11 : vector<8x256xf32>
    %c0_11 = arith.constant 0 : index
    %c0_12 = arith.constant 0 : index
    %13 = vector.load %arg5[%c0_11, %c0_12] : memref<64x64xbf16, #tpu.memory_space<vmem>>, vector<64x64xbf16>
    %cst_13 = arith.constant dense<0.000000e+00> : vector<64x256xf32>
    %14 = tpu.matmul %13, %2, %cst_13 {dimension_numbers = #tpu.dot_dimension_numbers<[1], [0], [0], [1], [0, 0, 1, 1], [], []>} : vector<64x64xbf16>, vector<64x256xbf16>, vector<64x256xf32> -> vector<64x256xf32>
    %c0_14 = arith.constant 0 : index
    %c0_15 = arith.constant 0 : index
    %15 = vector.load %arg8[%c0_14, %c0_15] : memref<64x1xf32, #tpu.memory_space<vmem>>, vector<64x1xf32>
    %16 = vector.broadcast %15 : vector<64x1xf32> to vector<64x256xf32>
    %17 = arith.addf %14, %16 : vector<64x256xf32>
    %18 = arith.truncf %7 : vector<8x256xf32> to vector<8x256xbf16>
    %c0_16 = arith.constant 0 : index
    %c0_17 = arith.constant 0 : index
    %c0_18 = arith.constant 0 : index
    %19 = vector.load %arg9[%c0_16, %c0_17, %c0_18] : memref<1x8x256xbf16, #tpu.memory_space<vmem>>, vector<1x8x256xbf16>
    %20 = vector.shape_cast %19 : vector<1x8x256xbf16> to vector<8x256xbf16>
    %21 = vector.shape_cast %18 : vector<8x256xbf16> to vector<1x8x256xbf16>
    tpu.vector_store %arg9[%c0_16, %c0_17, %c0_18], %21 {strides = array<i32>} : memref<1x8x256xbf16, #tpu.memory_space<vmem>>, vector<1x8x256xbf16>,
    %22 = arith.truncf %12 : vector<8x256xf32> to vector<8x256xbf16>
    %c0_19 = arith.constant 0 : index
    %c0_20 = arith.constant 0 : index
    %c0_21 = arith.constant 0 : index
    %23 = vector.load %arg10[%c0_19, %c0_20, %c0_21] : memref<1x8x256xbf16, #tpu.memory_space<vmem>>, vector<1x8x256xbf16>
    %24 = vector.shape_cast %23 : vector<1x8x256xbf16> to vector<8x256xbf16>
    %25 = vector.shape_cast %22 : vector<8x256xbf16> to vector<1x8x256xbf16>
    tpu.vector_store %arg10[%c0_19, %c0_20, %c0_21], %25 {strides = array<i32>} : memref<1x8x256xbf16, #tpu.memory_space<vmem>>, vector<1x8x256xbf16>,
    %26 = arith.truncf %17 : vector<64x256xf32> to vector<64x256xbf16>
    %c0_22 = arith.constant 0 : index
    %c0_23 = arith.constant 0 : index
    %c0_24 = arith.constant 0 : index
    %27 = vector.load %arg11[%c0_22, %c0_23, %c0_24] : memref<1x64x256xbf16, #tpu.memory_space<vmem>>, vector<1x64x256xbf16>
    %28 = vector.shape_cast %27 : vector<1x64x256xbf16> to vector<64x256xbf16>
    %29 = vector.shape_cast %26 : vector<64x256xbf16> to vector<1x64x256xbf16>
    tpu.vector_store %arg11[%c0_22, %c0_23, %c0_24], %29 {strides = array<i32>} : memref<1x64x256xbf16, #tpu.memory_space<vmem>>, vector<1x64x256xbf16>,
    return
  }
  func.func @transform_0(%arg0: i32, %arg1: i32) -> (i32, i32, i32) {
    %c0_i32 = arith.constant 0 : i32
    %c0_i32_0 = arith.constant 0 : i32
    return %arg0, %c0_i32, %arg1 : i32, i32, i32
  }
  func.func @transform_1(%arg0: i32, %arg1: i32) -> (i32, i32) {
    %c0_i32 = arith.constant 0 : i32
    %c0_i32_0 = arith.constant 0 : i32
    %c0_i32_1 = arith.constant 0 : i32
    return %c0_i32, %c0_i32_0 : i32, i32
  }
  func.func @transform_2(%arg0: i32, %arg1: i32) -> (i32, i32) {
    %c0_i32 = arith.constant 0 : i32
    %c0_i32_0 = arith.constant 0 : i32
    %c0_i32_1 = arith.constant 0 : i32
    return %c0_i32, %c0_i32_0 : i32, i32
  }
  func.func @transform_3(%arg0: i32, %arg1: i32) -> (i32, i32) {
    %c0_i32 = arith.constant 0 : i32
    %c0_i32_0 = arith.constant 0 : i32
    %c0_i32_1 = arith.constant 0 : i32
    return %c0_i32, %c0_i32_0 : i32, i32
  }
  func.func @transform_4(%arg0: i32, %arg1: i32) -> (i32, i32) {
    %c0_i32 = arith.constant 0 : i32
    %c0_i32_0 = arith.constant 0 : i32
    %c0_i32_1 = arith.constant 0 : i32
    return %c0_i32, %c0_i32_0 : i32, i32
  }
  func.func @transform_5(%arg0: i32, %arg1: i32) -> (i32, i32) {
    %c0_i32 = arith.constant 0 : i32
    %c0_i32_0 = arith.constant 0 : i32
    %c0_i32_1 = arith.constant 0 : i32
    return %c0_i32, %c0_i32_0 : i32, i32
  }
  func.func @transform_6(%arg0: i32, %arg1: i32) -> (i32, i32) {
    %c0_i32 = arith.constant 0 : i32
    %c0_i32_0 = arith.constant 0 : i32
    %c0_i32_1 = arith.constant 0 : i32
    return %c0_i32, %c0_i32_0 : i32, i32
  }
  func.func @transform_7(%arg0: i32, %arg1: i32) -> (i32, i32, i32) {
    %c0_i32 = arith.constant 0 : i32
    %c0_i32_0 = arith.constant 0 : i32
    return %arg0, %c0_i32, %arg1 : i32, i32, i32
  }
  func.func @transform_8(%arg0: i32, %arg1: i32) -> (i32, i32, i32) {
    %c0_i32 = arith.constant 0 : i32
    %c0_i32_0 = arith.constant 0 : i32
    return %arg0, %c0_i32, %arg1 : i32, i32, i32
  }
  func.func @transform_9(%arg0: i32, %arg1: i32) -> (i32, i32, i32) {
    %c0_i32 = arith.constant 0 : i32
    %c0_i32_0 = arith.constant 0 : i32
    return %arg0, %c0_i32, %arg1 : i32, i32, i32
  }
}

</mosaic_0001>

<llo_original>
// kernel: pam_forward.3
$region0: #{pam_forward.3}
  #allocation0 [shape = 'u32[]', space=smem, size = 0x4, offset = 0x4, fixed_abs, tag = 'smem constant byte address 0x4 - core index']
  #allocation1 [shape = 'u32[144,128]{1,0:T(1,128)}', space=vmem, size = 0x12000, scoped, tag = 'internal scratch']
  %s0 = inlined_call_operand.vmem [shape: bf16[2,8,256], index: 0, kind: input, shape index: {}]
  %s1 = inlined_call_operand.vmem [shape: bf16[2,8,256], index: 1, kind: input, shape index: {}]
  %s2 = inlined_call_operand.vmem [shape: bf16[2,64,256], index: 2, kind: input, shape index: {}]
  %s3 = inlined_call_operand.vmem [shape: f32[2,64,256], index: 3, kind: input, shape index: {}]
  %s4 = inlined_call_operand.vmem [shape: f32[2,64,256], index: 4, kind: output, shape index: {}]
  %s5 = sld [smem:[#allocation0]]
  $region49: #{pam_forward.3} parent=0
    _
  %s7 = ssub.s32 1, %s5
  %s8 = scalar_select 0, %s7, %s5
  loop: start=0, step=1, limit=4
  $region2: #{pam_forward.3} parent=0 // loop_pre_header
    _
  $region3: #{pam_forward.3} parent=0 // loop_header
    %s10 = sphi 0, %s14
    %p11 = scmp.ge.s32.totalorder %s10, 4
    %s17 = sphi 0, %s29
    %s18 = sphi 0, %s25
    %s19 = sphi 0, %s17
    %s20 = sphi 0, %s18
    %s21 = sphi 0, %s19
    %s22 = sphi 0, %s20
    %s34 = sphi 0, %s36
    %s37 = sphi 0, %s34
    %s38 = sphi 0, %s37
    %s54 = sphi 0, %s38
    %s60 = sphi 0, %s62
    %s63 = sphi 0, %s60
    %s64 = sphi 0, %s63
    %s80 = sphi 0, %s64
    %s86 = sphi 0, %s88
    %s89 = sphi 0, %s86
    %s90 = sphi 0, %s89
    %s106 = sphi 0, %s90
    %s114 = sphi 0, %s116
    %s117 = sphi 0, %s114
    %s118 = sphi 0, %s117
    %s134 = sphi 0, %s118
    %s142 = sphi 0, %s144
    %s145 = sphi 0, %s142
    %s146 = sphi 0, %s145
    %s162 = sphi 0, %s146
  $region4: #{pam_forward.3} parent=0 // loop_header_branch
    %13 = sbr.rel (%p11) target = $region8
  $region5: #{pam_forward.3} parent=0 // loop_body
    %s15 = ssub.s32 %s10, 1
    %s16 = ssub.s32 %s10, 2
    %s23 = sadd.s32 1, %s18
    %p24 = scmp.ge.s32.totalorder %s23, 1
    %s25 = scalar_select %p24, 0, %s23
    %s26 = sadd.s32 1, %s17
    %s27 = scalar_select %p24, %s26, %s17
    %p28 = scmp.ge.s32.totalorder %s27, 2
    %s29 = scalar_select %p28, 0, %s27
    %s30 = ssub.s32 %s17, %s29
    %s31 = ssub.s32 %s18, %s25
    %s32 = sor.u32 %s30, %s31
    %p33 = scmp.eq.s32.totalorder %s32, 0
    %s35 = sadd.s32 %s34, 1
    %s36 = scalar_select %p33, %s34, %s35
    %p39 = pneg %p33
    %p40 = scmp.eq.s32.totalorder %s10, 1
    %p41 = por %p39, %p40
    %p42 = scmp.ne.s32.totalorder %s34, %s37
    %p43 = scmp.eq.s32.totalorder %s10, 0
    %p44 = por %p42, %p43
    %p45 = scmp.ne.s32.totalorder %s34, %s37
    %p46 = scmp.eq.s32.totalorder %s15, 1
    %p47 = por %p45, %p46
    %p48 = scmp.ne.s32.totalorder %s37, %s38
    %p49 = scmp.eq.s32.totalorder %s15, 0
    %p50 = por %p48, %p49
    %p51 = scmp.ne.s32.totalorder %s37, %s38
    %p52 = scmp.eq.s32.totalorder %s16, 1
    %p53 = por %p51, %p52
    %p55 = scmp.ne.s32.totalorder %s38, %s54
    %p56 = scmp.eq.s32.totalorder %s16, 0
    %p57 = por %p55, %p56
    %s58 = ssub.s32 %s17, %s29
    %p59 = scmp.eq.s32.totalorder %s58, 0
    %s61 = sadd.s32 %s60, 1
    %s62 = scalar_select %p59, %s60, %s61
    %p65 = pneg %p59
    %p66 = scmp.eq.s32.totalorder %s10, 1
    %p67 = por %p65, %p66
    %p68 = scmp.ne.s32.totalorder %s60, %s63
    %p69 = scmp.eq.s32.totalorder %s10, 0
    %p70 = por %p68, %p69
    %p71 = scmp.ne.s32.totalorder %s60, %s63
    %p72 = scmp.eq.s32.totalorder %s15, 1
    %p73 = por %p71, %p72
    %p74 = scmp.ne.s32.totalorder %s63, %s64
    %p75 = scmp.eq.s32.totalorder %s15, 0
    %p76 = por %p74, %p75
    %p77 = scmp.ne.s32.totalorder %s63, %s64
    %p78 = scmp.eq.s32.totalorder %s16, 1
    %p79 = por %p77, %p78
    %p81 = scmp.ne.s32.totalorder %s64, %s80
    %p82 = scmp.eq.s32.totalorder %s16, 0
    %p83 = por %p81, %p82
    %s84 = ssub.s32 %s17, %s29
    %p85 = scmp.eq.s32.totalorder %s84, 0
    %s87 = sadd.s32 %s86, 1
    %s88 = scalar_select %p85, %s86, %s87
    %p91 = pneg %p85
    %p92 = scmp.eq.s32.totalorder %s10, 1
    %p93 = por %p91, %p92
    %p94 = scmp.ne.s32.totalorder %s86, %s89
    %p95 = scmp.eq.s32.totalorder %s10, 0
    %p96 = por %p94, %p95
    %p97 = scmp.ne.s32.totalorder %s86, %s89
    %p98 = scmp.eq.s32.totalorder %s15, 1
    %p99 = por %p97, %p98
    %p100 = scmp.ne.s32.totalorder %s89, %s90
    %p101 = scmp.eq.s32.totalorder %s15, 0
    %p102 = por %p100, %p101
    %p103 = scmp.ne.s32.totalorder %s89, %s90
    %p104 = scmp.eq.s32.totalorder %s16, 1
    %p105 = por %p103, %p104
    %p107 = scmp.ne.s32.totalorder %s90, %s106
    %p108 = scmp.eq.s32.totalorder %s16, 0
    %p109 = por %p107, %p108
    %s110 = ssub.s32 %s17, %s29
    %s111 = ssub.s32 %s18, %s25
    %s112 = sor.u32 %s110, %s111
    %p113 = scmp.eq.s32.totalorder %s112, 0
    %s115 = sadd.s32 %s114, 1
    %s116 = scalar_select %p113, %s114, %s115
    %p119 = pneg %p113
    %p120 = scmp.eq.s32.totalorder %s10, 1
    %p121 = por %p119, %p120
    %p122 = scmp.ne.s32.totalorder %s114, %s117
    %p123 = scmp.eq.s32.totalorder %s10, 0
    %p124 = por %p122, %p123
    %p125 = scmp.ne.s32.totalorder %s114, %s117
    %p126 = scmp.eq.s32.totalorder %s15, 1
    %p127 = por %p125, %p126
    %p128 = scmp.ne.s32.totalorder %s117, %s118
    %p129 = scmp.eq.s32.totalorder %s15, 0
    %p130 = por %p128, %p129
    %p131 = scmp.ne.s32.totalorder %s117, %s118
    %p132 = scmp.eq.s32.totalorder %s16, 1
    %p133 = por %p131, %p132
    %p135 = scmp.ne.s32.totalorder %s118, %s134
    %p136 = scmp.eq.s32.totalorder %s16, 0
    %p137 = por %p135, %p136
    %s138 = ssub.s32 %s17, %s29
    %s139 = ssub.s32 %s18, %s25
    %s140 = sor.u32 %s138, %s139
    %p141 = scmp.eq.s32.totalorder %s140, 0
    %s143 = sadd.s32 %s142, 1
    %s144 = scalar_select %p141, %s142, %s143
    %p147 = pneg %p141
    %p148 = scmp.eq.s32.totalorder %s10, 1
    %p149 = por %p147, %p148
    %p150 = scmp.ne.s32.totalorder %s142, %s145
    %p151 = scmp.eq.s32.totalorder %s10, 0
    %p152 = por %p150, %p151
    %p153 = scmp.ne.s32.totalorder %s142, %s145
    %p154 = scmp.eq.s32.totalorder %s15, 1
    %p155 = por %p153, %p154
    %p156 = scmp.ne.s32.totalorder %s145, %s146
    %p157 = scmp.eq.s32.totalorder %s15, 0
    %p158 = por %p156, %p157
    %p159 = scmp.ne.s32.totalorder %s145, %s146
    %p160 = scmp.eq.s32.totalorder %s16, 1
    %p161 = por %p159, %p160
    %p163 = scmp.ne.s32.totalorder %s146, %s162
    %p164 = scmp.eq.s32.totalorder %s16, 0
    %p165 = por %p163, %p164
    %p166 = scmp.le.s32.totalorder 1, %s10
    %p167 = scmp.lt.s32.totalorder %s10, 3
    %p168 = pnand %p166, %p167
    %p169 = pneg %p168
    // Predicated region
    $region9: #{pam_forward.3} parent=5 // pred_check
      _
    $region10: #{pam_forward.3} parent=5 // pred_check_branch
      %171 = sbr.rel (%p168) target = $region12
    $region11: #{pam_forward.3} parent=5 // pred_region
      %s172 = ssub.s32 %s10, 1
    $region12: #{pam_forward.3} parent=5 // pred_fallthru
      _
    %p173 = scmp.lt.s32.totalorder %s10, 2
    // Predicated region
    $region13: #{pam_forward.3} parent=5 // pred_check
      %p174 = pneg %p173
    $region14: #{pam_forward.3} parent=5 // pred_check_branch
      %176 = sbr.rel (%p174) target = $region16
    $region15: #{pam_forward.3} parent=5 // pred_region
      // Predicated region
      $region17: #{pam_forward.3} parent=15 // pred_check
        %p177 = pneg %p44
      $region18: #{pam_forward.3} parent=15 // pred_check_branch
        %179 = sbr.rel (%p177) target = $region20
      $region19: #{pam_forward.3} parent=15 // pred_region
        %s180 = smul.u32 2, %s18
        %p181 = scmp.lt.s32.totalorder %s17, 1
        %s182 = scalar_select %p181, %s17, 1
        %p183 = scmp.lt.s32.totalorder %s180, 1
        %s184 = scalar_select %p183, %s180, 1
        %s185 = smul.addr %s182, 2
        %s186 = sadd.s32 %s184, %s185
        %s187 = smul.addr %s186, 4
        %s188 = scalar_lea.vmem %s0, %s187
        %s189 = smul.u32 2, %s18
      $region20: #{pam_forward.3} parent=15 // pred_fallthru
        _
      // Predicated region
      $region21: #{pam_forward.3} parent=15 // pred_check
        %p190 = pneg %p70
      $region22: #{pam_forward.3} parent=15 // pred_check_branch
        %192 = sbr.rel (%p190) target = $region24
      $region23: #{pam_forward.3} parent=15 // pred_region
        %p193 = scmp.lt.s32.totalorder %s17, 1
        %s194 = scalar_select %p193, %s17, 1
        %s195 = smul.addr %s194, 2
        %s196 = smul.addr %s195, 4
        %s197 = scalar_lea.vmem %s1, %s196
      $region24: #{pam_forward.3} parent=15 // pred_fallthru
        _
      // Predicated region
      $region25: #{pam_forward.3} parent=15 // pred_check
        %p198 = pneg %p96
      $region26: #{pam_forward.3} parent=15 // pred_check_branch
        %200 = sbr.rel (%p198) target = $region28
      $region27: #{pam_forward.3} parent=15 // pred_region
        %p201 = scmp.lt.s32.totalorder %s17, 1
        %s202 = scalar_select %p201, %s17, 1
        %s203 = smul.addr %s202, 16
        %s204 = smul.addr %s203, 4
        %s205 = scalar_lea.vmem %s2, %s204
      $region28: #{pam_forward.3} parent=15 // pred_fallthru
        _
      // Predicated region
      $region29: #{pam_forward.3} parent=15 // pred_check
        %p206 = pneg %p124
      $region30: #{pam_forward.3} parent=15 // pred_check_branch
        %208 = sbr.rel (%p206) target = $region32
      $region31: #{pam_forward.3} parent=15 // pred_region
        %s209 = smul.u32 2, %s18
        %p210 = scmp.lt.s32.totalorder %s17, 1
        %s211 = scalar_select %p210, %s17, 1
        %p212 = scmp.lt.s32.totalorder %s209, 1
        %s213 = scalar_select %p212, %s209, 1
        %s214 = smul.addr %s211, 16
        %s215 = sadd.s32 %s213, %s214
        %s216 = smul.addr %s215, 8
        %s217 = scalar_lea.vmem %s3, %s216
        %s218 = smul.u32 2, %s18
      $region32: #{pam_forward.3} parent=15 // pred_fallthru
        _
    $region16: #{pam_forward.3} parent=5 // pred_fallthru
      _
    %p219 = scmp.le.s32.totalorder 1, %s10
    %p220 = scmp.lt.s32.totalorder %s10, 3
    %p221 = pnand %p219, %p220
    %p222 = pneg %p221
    // Predicated region
    $region33: #{pam_forward.3} parent=5 // pred_check
      _
    $region34: #{pam_forward.3} parent=5 // pred_check_branch
      %224 = sbr.rel (%p221) target = $region36
    $region35: #{pam_forward.3} parent=5 // pred_region
      %s225 = ssub.s32 %s10, 1
      %s226 = smul.u32 2, %s20
      %p227 = scmp.lt.s32.totalorder %s19, 1
      %s228 = scalar_select %p227, %s19, 1
      %p229 = scmp.lt.s32.totalorder %s226, 1
      %s230 = scalar_select %p229, %s226, 1
      %s231 = smul.addr %s228, 2
      %s232 = sadd.s32 %s230, %s231
      %s233 = smul.addr %s232, 4
      %s234 = scalar_lea.vmem %s0, %s233
      %p235 = pneg %p50
      %p236 = pneg %p47
      %p237 = scmp.lt.s32.totalorder %s19, 1
      %s238 = scalar_select %p237, %s19, 1
      %s239 = smul.addr %s238, 2
      %s240 = smul.addr %s239, 4
      %s241 = scalar_lea.vmem %s1, %s240
      %p242 = pneg %p76
      %p243 = pneg %p73
      %p244 = scmp.lt.s32.totalorder %s19, 1
      %s245 = scalar_select %p244, %s19, 1
      %s246 = smul.addr %s245, 16
      %s247 = smul.addr %s246, 4
      %s248 = scalar_lea.vmem %s2, %s247
      %p249 = pneg %p102
      %p250 = pneg %p99
      %s251 = smul.u32 2, %s20
      %p252 = scmp.lt.s32.totalorder %s19, 1
      %s253 = scalar_select %p252, %s19, 1
      %p254 = scmp.lt.s32.totalorder %s251, 1
      %s255 = scalar_select %p254, %s251, 1
      %s256 = smul.addr %s253, 16
      %s257 = sadd.s32 %s255, %s256
      %s258 = smul.addr %s257, 8
      %s259 = scalar_lea.vmem %s3, %s258
      %p260 = pneg %p130
      %p261 = pneg %p127
      %p262 = pneg %p158
      %p263 = pneg %p155
      %s264 = smul.u32 2, %s20
      %p265 = scmp.lt.s32.totalorder %s19, 1
      %s266 = scalar_select %p265, %s19, 1
      %p267 = scmp.lt.s32.totalorder %s264, 1
      %s268 = scalar_select %p267, %s264, 1
      %s269 = smul.addr %s266, 16
      %s270 = sadd.s32 %s268, %s269
      %s271 = smul.addr %s270, 8
      %s272 = scalar_lea.vmem %s4, %s271
      %s273 = smul.u32 2, %s20
      %p274 = scmp.lt.s32.totalorder %s19, 1
      %s275 = scalar_select %p274, %s19, 1
      %p276 = scmp.lt.s32.totalorder %s273, 1
      %s277 = scalar_select %p276, %s273, 1
      %s278 = smul.addr %s275, 2
      %s279 = sadd.s32 %s277, %s278
      %s280 = smul.addr %s279, 4
      %s281 = scalar_lea.vmem %s0, %s280
      %s282 = smul.u32 2, %s20
      %p283 = scmp.lt.s32.totalorder %s19, 1
      %s284 = scalar_select %p283, %s19, 1
      %s285 = smul.addr %s284, 2
      %s286 = smul.addr %s285, 4
      %s287 = scalar_lea.vmem %s1, %s286
      %p288 = scmp.lt.s32.totalorder %s19, 1
      %s289 = scalar_select %p288, %s19, 1
      %s290 = smul.addr %s289, 16
      %s291 = smul.addr %s290, 4
      %s292 = scalar_lea.vmem %s2, %s291
      %s293 = smul.u32 2, %s20
      %p294 = scmp.lt.s32.totalorder %s19, 1
      %s295 = scalar_select %p294, %s19, 1
      %p296 = scmp.lt.s32.totalorder %s293, 1
      %s297 = scalar_select %p296, %s293, 1
      %s298 = smul.addr %s295, 16
      %s299 = sadd.s32 %s297, %s298
      %s300 = smul.addr %s299, 8
      %s301 = scalar_lea.vmem %s3, %s300
      %s302 = smul.u32 2, %s20
      %s303 = smul.u32 2, %s20
      %p304 = scmp.lt.s32.totalorder %s19, 1
      %s305 = scalar_select %p304, %s19, 1
      %p306 = scmp.lt.s32.totalorder %s303, 1
      %s307 = scalar_select %p306, %s303, 1
      %s308 = smul.addr %s305, 16
      %s309 = sadd.s32 %s307, %s308
      %s310 = smul.addr %s309, 8
      %s311 = scalar_lea.vmem %s4, %s310
      %s312 = smul.u32 2, %s20
      %v314 = vld [vmem:[%s281] sm:$0xff]
      %v315 = vld [vmem:[%s287] sm:$0xff]
      %v317 = vunpack.c.l.b16 %v314
      %v318 = vunpack.c.h.b16 %v314
      %v319 = vpack.c.b16 %v317, %v317
      %v320 = vpack.c.b16 %v318, %v318
      %323 = vxpose.xlu0.c.b16.start [1/8] %v319, 128
      %324 = vxpose.xlu0.c.b16.cont [2/8] 0, 128
      %325 = vxpose.xlu0.c.b16.cont [3/8] 0, 128
      %326 = vxpose.xlu0.c.b16.cont [4/8] 0, 128
      %327 = vxpose.xlu0.c.b16.cont [5/8] 0, 128
      %328 = vxpose.xlu0.c.b16.cont [6/8] 0, 128
      %329 = vxpose.xlu0.c.b16.cont [7/8] 0, 128
      %330 = vxpose.xlu0.c.b16.end [8/8] 0, 128
      %v331 = vpop.trf.xlu0
      %v332 = vpop.trf.xlu0
      %v333 = vpop.trf.xlu0
      %v334 = vpop.trf.xlu0
      %v335 = vpop.trf.xlu0
      %v336 = vpop.trf.xlu0
      %v337 = vpop.trf.xlu0
      %v338 = vpop.trf.xlu0
      %339 = vxpose.xlu0.c.b16.start [1/8] %v320, 128
      %340 = vxpose.xlu0.c.b16.cont [2/8] 0, 128
      %341 = vxpose.xlu0.c.b16.cont [3/8] 0, 128
      %342 = vxpose.xlu0.c.b16.cont [4/8] 0, 128
      %343 = vxpose.xlu0.c.b16.cont [5/8] 0, 128
      %344 = vxpose.xlu0.c.b16.cont [6/8] 0, 128
      %345 = vxpose.xlu0.c.b16.cont [7/8] 0, 128
      %346 = vxpose.xlu0.c.b16.end [8/8] 0, 128
      %v347 = vpop.trf.xlu0
      %v348 = vpop.trf.xlu0
      %v349 = vpop.trf.xlu0
      %v350 = vpop.trf.xlu0
      %v351 = vpop.trf.xlu0
      %v352 = vpop.trf.xlu0
      %v353 = vpop.trf.xlu0
      %v354 = vpop.trf.xlu0
      %v356 = vunpack.c.l.b16 %v315
      %v357 = vunpack.c.h.b16 %v315
      %v358 = vpack.c.b16 %v356, %v356
      %v359 = vpack.c.b16 %v357, %v357
      %vm360 = vcmask 64512
      %v362 = vsel %vm360, %v331, 0
      %v365 = vsel %vm360, %v332, 0
      %v368 = vsel %vm360, %v333, 0
      %v371 = vsel %vm360, %v334, 0
      %v374 = vsel %vm360, %v335, 0
      %v377 = vsel %vm360, %v336, 0
      %v380 = vsel %vm360, %v337, 0
      %v383 = vsel %vm360, %v338, 0
      %v386 = vsel %vm360, %v347, 0
      %v389 = vsel %vm360, %v348, 0
      %v392 = vsel %vm360, %v349, 0
      %v395 = vsel %vm360, %v350, 0
      %v398 = vsel %vm360, %v351, 0
      %v401 = vsel %vm360, %v352, 0
      %v404 = vsel %vm360, %v353, 0
      %v407 = vsel %vm360, %v354, 0
      %vm409 = vcmask 1043456
      %v411 = vsel %vm409, %v358, 0
      %v414 = vsel %vm409, %v359, 0
      %416 = vmatprep.subr.bf16.mxu0 0
      %417 = vmatpush1.bf16.msra.mxu0 0
      %418 = vmatprep.subr.bf16.mxu0 0
      %419 = vmatpush1.bf16.msra.mxu0 0
      %420 = vmatprep.subr.bf16.mxu0 0
      %421 = vmatpush1.bf16.msra.mxu0 0
      %422 = vmatprep.subr.bf16.mxu0 0
      %423 = vmatpush1.bf16.msra.mxu0 0
      %424 = vmatprep.subr.bf16.mxu0 0
      %425 = vmatpush1.bf16.msra.mxu0 0
      %426 = vmatprep.subr.bf16.mxu0 0
      %427 = vmatpush1.bf16.msra.mxu0 0
      %428 = vmatprep.subr.bf16.mxu0 0
      %429 = vmatpush1.bf16.msra.mxu0 0
      %430 = vmatprep.subr.bf16.mxu0 %v414
      %431 = vmatpush1.bf16.msra.mxu0 %v411
      %432 = vmatprep.subr.bf16.mxu0 0
      %433 = vmatpush2.bf16.msra.mxu0 0
      %434 = vmatprep.subr.bf16.mxu0 0
      %435 = vmatpush2.bf16.msra.mxu0 0
      %436 = vmatprep.subr.bf16.mxu0 0
      %437 = vmatpush2.bf16.msra.mxu0 0
      %438 = vmatprep.subr.bf16.mxu0 0
      %439 = vmatpush2.bf16.msra.mxu0 0
      %440 = vmatprep.subr.bf16.mxu0 0
      %441 = vmatpush2.bf16.msra.mxu0 0
      %442 = vmatprep.subr.bf16.mxu0 0
      %443 = vmatpush2.bf16.msra.mxu0 0
      %444 = vmatprep.subr.bf16.mxu0 0
      %445 = vmatpush2.bf16.msra.mxu0 0
      %446 = vmatprep.subr.bf16.mxu0 0
      %447 = vmatpush2.bf16.msra.mxu0 0
      %448 = vmatprep.mubr.bf16.mxu0 0
      %449 = vmatmul.mubr.bf16.gmra.mxu0 %v362
      %v450 = vpop.f32.mrf.mxu0
      %v451 = vadd.f32 0.0, %v450
      %v452 = vpop.f32.mrf.mxu0
      %v453 = vadd.f32 0.0, %v452
      %v454 = vpop.f32.mrf.mxu0
      %v455 = vadd.f32 0.0, %v454
      %v456 = vpop.f32.mrf.mxu0
      %v457 = vadd.f32 0.0, %v456
      %458 = vmatprep.mubr.bf16.mxu0 0
      %459 = vmatmul.mubr.bf16.gmra.mxu0 %v365
      %v460 = vpop.f32.mrf.mxu0
      %v461 = vadd.f32 0.0, %v460
      %v462 = vpop.f32.mrf.mxu0
      %v463 = vadd.f32 0.0, %v462
      %v464 = vpop.f32.mrf.mxu0
      %v465 = vadd.f32 0.0, %v464
      %v466 = vpop.f32.mrf.mxu0
      %v467 = vadd.f32 0.0, %v466
      %468 = vmatprep.mubr.bf16.mxu0 0
      %469 = vmatmul.mubr.bf16.gmra.mxu0 %v368
      %v470 = vpop.f32.mrf.mxu0
      %v471 = vadd.f32 0.0, %v470
      %v472 = vpop.f32.mrf.mxu0
      %v473 = vadd.f32 0.0, %v472
      %v474 = vpop.f32.mrf.mxu0
      %v475 = vadd.f32 0.0, %v474
      %v476 = vpop.f32.mrf.mxu0
      %v477 = vadd.f32 0.0, %v476
      %478 = vmatprep.mubr.bf16.mxu0 0
      %479 = vmatmul.mubr.bf16.gmra.mxu0 %v371
      %v480 = vpop.f32.mrf.mxu0
      %v481 = vadd.f32 0.0, %v480
      %v482 = vpop.f32.mrf.mxu0
      %v483 = vadd.f32 0.0, %v482
      %v484 = vpop.f32.mrf.mxu0
      %v485 = vadd.f32 0.0, %v484
      %v486 = vpop.f32.mrf.mxu0
      %v487 = vadd.f32 0.0, %v486
      %488 = vmatprep.mubr.bf16.mxu0 0
      %489 = vmatmul.mubr.bf16.gmra.mxu0 %v374
      %v490 = vpop.f32.mrf.mxu0
      %v491 = vadd.f32 0.0, %v490
      %v492 = vpop.f32.mrf.mxu0
      %v493 = vadd.f32 0.0, %v492
      %v494 = vpop.f32.mrf.mxu0
      %v495 = vadd.f32 0.0, %v494
      %v496 = vpop.f32.mrf.mxu0
      %v497 = vadd.f32 0.0, %v496
      %498 = vmatprep.mubr.bf16.mxu0 0
      %499 = vmatmul.mubr.bf16.gmra.mxu0 %v377
      %v500 = vpop.f32.mrf.mxu0
      %v501 = vadd.f32 0.0, %v500
      %v502 = vpop.f32.mrf.mxu0
      %v503 = vadd.f32 0.0, %v502
      %v504 = vpop.f32.mrf.mxu0
      %v505 = vadd.f32 0.0, %v504
      %v506 = vpop.f32.mrf.mxu0
      %v507 = vadd.f32 0.0, %v506
      %508 = vmatprep.mubr.bf16.mxu0 0
      %509 = vmatmul.mubr.bf16.gmra.mxu0 %v380
      %v510 = vpop.f32.mrf.mxu0
      %v511 = vadd.f32 0.0, %v510
      %v512 = vpop.f32.mrf.mxu0
      %v513 = vadd.f32 0.0, %v512
      %v514 = vpop.f32.mrf.mxu0
      %v515 = vadd.f32 0.0, %v514
      %v516 = vpop.f32.mrf.mxu0
      %v517 = vadd.f32 0.0, %v516
      %518 = vmatprep.mubr.bf16.mxu0 0
      %519 = vmatmul.mubr.bf16.gmra.mxu0 %v383
      %v520 = vpop.f32.mrf.mxu0
      %v521 = vadd.f32 0.0, %v520
      %v522 = vpop.f32.mrf.mxu0
      %v523 = vadd.f32 0.0, %v522
      %v524 = vpop.f32.mrf.mxu0
      %v525 = vadd.f32 0.0, %v524
      %v526 = vpop.f32.mrf.mxu0
      %v527 = vadd.f32 0.0, %v526
      %528 = vmatprep.mubr.bf16.mxu0 0
      %529 = vmatmul.mubr.bf16.gmra.mxu0 %v386
      %v530 = vpop.f32.mrf.mxu0
      %v531 = vadd.f32 0.0, %v530
      %v532 = vpop.f32.mrf.mxu0
      %v533 = vadd.f32 0.0, %v532
      %v534 = vpop.f32.mrf.mxu0
      %v535 = vadd.f32 0.0, %v534
      %v536 = vpop.f32.mrf.mxu0
      %v537 = vadd.f32 0.0, %v536
      %538 = vmatprep.mubr.bf16.mxu0 0
      %539 = vmatmul.mubr.bf16.gmra.mxu0 %v389
      %v540 = vpop.f32.mrf.mxu0
      %v541 = vadd.f32 0.0, %v540
      %v542 = vpop.f32.mrf.mxu0
      %v543 = vadd.f32 0.0, %v542
      %v544 = vpop.f32.mrf.mxu0
      %v545 = vadd.f32 0.0, %v544
      %v546 = vpop.f32.mrf.mxu0
      %v547 = vadd.f32 0.0, %v546
      %548 = vmatprep.mubr.bf16.mxu0 0
      %549 = vmatmul.mubr.bf16.gmra.mxu0 %v392
      %v550 = vpop.f32.mrf.mxu0
      %v551 = vadd.f32 0.0, %v550
      %v552 = vpop.f32.mrf.mxu0
      %v553 = vadd.f32 0.0, %v552
      %v554 = vpop.f32.mrf.mxu0
      %v555 = vadd.f32 0.0, %v554
      %v556 = vpop.f32.mrf.mxu0
      %v557 = vadd.f32 0.0, %v556
      %558 = vmatprep.mubr.bf16.mxu0 0
      %559 = vmatmul.mubr.bf16.gmra.mxu0 %v395
      %v560 = vpop.f32.mrf.mxu0
      %v561 = vadd.f32 0.0, %v560
      %v562 = vpop.f32.mrf.mxu0
      %v563 = vadd.f32 0.0, %v562
      %v564 = vpop.f32.mrf.mxu0
      %v565 = vadd.f32 0.0, %v564
      %v566 = vpop.f32.mrf.mxu0
      %v567 = vadd.f32 0.0, %v566
      %568 = vmatprep.mubr.bf16.mxu0 0
      %569 = vmatmul.mubr.bf16.gmra.mxu0 %v398
      %v570 = vpop.f32.mrf.mxu0
      %v571 = vadd.f32 0.0, %v570
      %v572 = vpop.f32.mrf.mxu0
      %v573 = vadd.f32 0.0, %v572
      %v574 = vpop.f32.mrf.mxu0
      %v575 = vadd.f32 0.0, %v574
      %v576 = vpop.f32.mrf.mxu0
      %v577 = vadd.f32 0.0, %v576
      %578 = vmatprep.mubr.bf16.mxu0 0
      %579 = vmatmul.mubr.bf16.gmra.mxu0 %v401
      %v580 = vpop.f32.mrf.mxu0
      %v581 = vadd.f32 0.0, %v580
      %v582 = vpop.f32.mrf.mxu0
      %v583 = vadd.f32 0.0, %v582
      %v584 = vpop.f32.mrf.mxu0
      %v585 = vadd.f32 0.0, %v584
      %v586 = vpop.f32.mrf.mxu0
      %v587 = vadd.f32 0.0, %v586
      %588 = vmatprep.mubr.bf16.mxu0 0
      %589 = vmatmul.mubr.bf16.gmra.mxu0 %v404
      %v590 = vpop.f32.mrf.mxu0
      %v591 = vadd.f32 0.0, %v590
      %v592 = vpop.f32.mrf.mxu0
      %v593 = vadd.f32 0.0, %v592
      %v594 = vpop.f32.mrf.mxu0
      %v595 = vadd.f32 0.0, %v594
      %v596 = vpop.f32.mrf.mxu0
      %v597 = vadd.f32 0.0, %v596
      %598 = vmatprep.mubr.bf16.mxu0 0
      %599 = vmatmul.mubr.bf16.gmra.mxu0 %v407
      %v600 = vpop.f32.mrf.mxu0
      %v601 = vadd.f32 0.0, %v600
      %v602 = vpop.f32.mrf.mxu0
      %v603 = vadd.f32 0.0, %v602
      %v604 = vpop.f32.mrf.mxu0
      %v605 = vadd.f32 0.0, %v604
      %v606 = vpop.f32.mrf.mxu0
      %v607 = vadd.f32 0.0, %v606
      %608 = vdwg.mxu0
      %v609 = vmax.f32 %v451, %v453
      %610 = vmax.xlane.f32.xlu0 %v609
      %v611 = vpop.xlane.xlu0 %610
      %v612 = vmax.f32 %v455, %v457
      %613 = vmax.xlane.f32.xlu0 %v612
      %v614 = vpop.xlane.xlu0 %613
      %v615 = vmax.f32 %v461, %v463
      %616 = vmax.xlane.f32.xlu0 %v615
      %v617 = vpop.xlane.xlu0 %616
      %v618 = vmax.f32 %v465, %v467
      %619 = vmax.xlane.f32.xlu0 %v618
      %v620 = vpop.xlane.xlu0 %619
      %v621 = vmax.f32 %v471, %v473
      %622 = vmax.xlane.f32.xlu0 %v621
      %v623 = vpop.xlane.xlu0 %622
      %v624 = vmax.f32 %v475, %v477
      %625 = vmax.xlane.f32.xlu0 %v624
      %v626 = vpop.xlane.xlu0 %625
      %v627 = vmax.f32 %v481, %v483
      %628 = vmax.xlane.f32.xlu0 %v627
      %v629 = vpop.xlane.xlu0 %628
      %v630 = vmax.f32 %v485, %v487
      %631 = vmax.xlane.f32.xlu0 %v630
      %v632 = vpop.xlane.xlu0 %631
      %v633 = vmax.f32 %v491, %v493
      %634 = vmax.xlane.f32.xlu0 %v633
      %v635 = vpop.xlane.xlu0 %634
      %v636 = vmax.f32 %v495, %v497
      %637 = vmax.xlane.f32.xlu0 %v636
      %v638 = vpop.xlane.xlu0 %637
      %v639 = vmax.f32 %v501, %v503
      %640 = vmax.xlane.f32.xlu0 %v639
      %v641 = vpop.xlane.xlu0 %640
      %v642 = vmax.f32 %v505, %v507
      %643 = vmax.xlane.f32.xlu0 %v642
      %v644 = vpop.xlane.xlu0 %643
      %v645 = vmax.f32 %v511, %v513
      %646 = vmax.xlane.f32.xlu0 %v645
      %v647 = vpop.xlane.xlu0 %646
      %v648 = vmax.f32 %v515, %v517
      %649 = vmax.xlane.f32.xlu0 %v648
      %v650 = vpop.xlane.xlu0 %649
      %v651 = vmax.f32 %v521, %v523
      %652 = vmax.xlane.f32.xlu0 %v651
      %v653 = vpop.xlane.xlu0 %652
      %v654 = vmax.f32 %v525, %v527
      %655 = vmax.xlane.f32.xlu0 %v654
      %v656 = vpop.xlane.xlu0 %655
      %v657 = vmax.f32 %v531, %v533
      %658 = vmax.xlane.f32.xlu0 %v657
      %v659 = vpop.xlane.xlu0 %658
      %v660 = vmax.f32 %v535, %v537
      %661 = vmax.xlane.f32.xlu0 %v660
      %v662 = vpop.xlane.xlu0 %661
      %v663 = vmax.f32 %v541, %v543
      %664 = vmax.xlane.f32.xlu0 %v663
      %v665 = vpop.xlane.xlu0 %664
      %v666 = vmax.f32 %v545, %v547
      %667 = vmax.xlane.f32.xlu0 %v666
      %v668 = vpop.xlane.xlu0 %667
      %v669 = vmax.f32 %v551, %v553
      %670 = vmax.xlane.f32.xlu0 %v669
      %v671 = vpop.xlane.xlu0 %670
      %v672 = vmax.f32 %v555, %v557
      %673 = vmax.xlane.f32.xlu0 %v672
      %v674 = vpop.xlane.xlu0 %673
      %v675 = vmax.f32 %v561, %v563
      %676 = vmax.xlane.f32.xlu0 %v675
      %v677 = vpop.xlane.xlu0 %676
      %v678 = vmax.f32 %v565, %v567
      %679 = vmax.xlane.f32.xlu0 %v678
      %v680 = vpop.xlane.xlu0 %679
      %v681 = vmax.f32 %v571, %v573
      %682 = vmax.xlane.f32.xlu0 %v681
      %v683 = vpop.xlane.xlu0 %682
      %v684 = vmax.f32 %v575, %v577
      %685 = vmax.xlane.f32.xlu0 %v684
      %v686 = vpop.xlane.xlu0 %685
      %v687 = vmax.f32 %v581, %v583
      %688 = vmax.xlane.f32.xlu0 %v687
      %v689 = vpop.xlane.xlu0 %688
      %v690 = vmax.f32 %v585, %v587
      %691 = vmax.xlane.f32.xlu0 %v690
      %v692 = vpop.xlane.xlu0 %691
      %v693 = vmax.f32 %v591, %v593
      %694 = vmax.xlane.f32.xlu0 %v693
      %v695 = vpop.xlane.xlu0 %694
      %v696 = vmax.f32 %v595, %v597
      %697 = vmax.xlane.f32.xlu0 %v696
      %v698 = vpop.xlane.xlu0 %697
      %v699 = vmax.f32 %v601, %v603
      %700 = vmax.xlane.f32.xlu0 %v699
      %v701 = vpop.xlane.xlu0 %700
      %v702 = vmax.f32 %v605, %v607
      %703 = vmax.xlane.f32.xlu0 %v702
      %v704 = vpop.xlane.xlu0 %703
      %v705 = vsub.f32 %v451, %v611
      %v706 = vsub.f32 %v453, %v611
      %v707 = vsub.f32 %v455, %v614
      %v708 = vsub.f32 %v457, %v614
      %v709 = vsub.f32 %v461, %v617
      %v710 = vsub.f32 %v463, %v617
      %v711 = vsub.f32 %v465, %v620
      %v712 = vsub.f32 %v467, %v620
      %v713 = vsub.f32 %v471, %v623
      %v714 = vsub.f32 %v473, %v623
      %v715 = vsub.f32 %v475, %v626
      %v716 = vsub.f32 %v477, %v626
      %v717 = vsub.f32 %v481, %v629
      %v718 = vsub.f32 %v483, %v629
      %v719 = vsub.f32 %v485, %v632
      %v720 = vsub.f32 %v487, %v632
      %v721 = vsub.f32 %v491, %v635
      %v722 = vsub.f32 %v493, %v635
      %v723 = vsub.f32 %v495, %v638
      %v724 = vsub.f32 %v497, %v638
      %v725 = vsub.f32 %v501, %v641
      %v726 = vsub.f32 %v503, %v641
      %v727 = vsub.f32 %v505, %v644
      %v728 = vsub.f32 %v507, %v644
      %v729 = vsub.f32 %v511, %v647
      %v730 = vsub.f32 %v513, %v647
      %v731 = vsub.f32 %v515, %v650
      %v732 = vsub.f32 %v517, %v650
      %v733 = vsub.f32 %v521, %v653
      %v734 = vsub.f32 %v523, %v653
      %v735 = vsub.f32 %v525, %v656
      %v736 = vsub.f32 %v527, %v656
      %v737 = vsub.f32 %v531, %v659
      %v738 = vsub.f32 %v533, %v659
      %v739 = vsub.f32 %v535, %v662
      %v740 = vsub.f32 %v537, %v662
      %v741 = vsub.f32 %v541, %v665
      %v742 = vsub.f32 %v543, %v665
      %v743 = vsub.f32 %v545, %v668
      %v744 = vsub.f32 %v547, %v668
      %v745 = vsub.f32 %v551, %v671
      %v746 = vsub.f32 %v553, %v671
      %v747 = vsub.f32 %v555, %v674
      %v748 = vsub.f32 %v557, %v674
      %v749 = vsub.f32 %v561, %v677
      %v750 = vsub.f32 %v563, %v677
      %v751 = vsub.f32 %v565, %v680
      %v752 = vsub.f32 %v567, %v680
      %v753 = vsub.f32 %v571, %v683
      %v754 = vsub.f32 %v573, %v683
      %v755 = vsub.f32 %v575, %v686
      %v756 = vsub.f32 %v577, %v686
      %v757 = vsub.f32 %v581, %v689
      %v758 = vsub.f32 %v583, %v689
      %v759 = vsub.f32 %v585, %v692
      %v760 = vsub.f32 %v587, %v692
      %v761 = vsub.f32 %v591, %v695
      %v762 = vsub.f32 %v593, %v695
      %v763 = vsub.f32 %v595, %v698
      %v764 = vsub.f32 %v597, %v698
      %v765 = vsub.f32 %v601, %v701
      %v766 = vsub.f32 %v603, %v701
      %v767 = vsub.f32 %v605, %v704
      %v768 = vsub.f32 %v607, %v704
      %v769 = vmul.f32 %v705, 1.442695
      %v770 = vpow.pop %v769
      %v771 = vmul.f32 %v706, 1.442695
      %v772 = vpow.pop %v771
      %v773 = vmul.f32 %v707, 1.442695
      %v774 = vpow.pop %v773
      %v775 = vmul.f32 %v708, 1.442695
      %v776 = vpow.pop %v775
      %v777 = vmul.f32 %v709, 1.442695
      %v778 = vpow.pop %v777
      %v779 = vmul.f32 %v710, 1.442695
      %v780 = vpow.pop %v779
      %v781 = vmul.f32 %v711, 1.442695
      %v782 = vpow.pop %v781
      %v783 = vmul.f32 %v712, 1.442695
      %v784 = vpow.pop %v783
      %v785 = vmul.f32 %v713, 1.442695
      %v786 = vpow.pop %v785
      %v787 = vmul.f32 %v714, 1.442695
      %v788 = vpow.pop %v787
      %v789 = vmul.f32 %v715, 1.442695
      %v790 = vpow.pop %v789
      %v791 = vmul.f32 %v716, 1.442695
      %v792 = vpow.pop %v791
      %v793 = vmul.f32 %v717, 1.442695
      %v794 = vpow.pop %v793
      %v795 = vmul.f32 %v718, 1.442695
      %v796 = vpow.pop %v795
      %v797 = vmul.f32 %v719, 1.442695
      %v798 = vpow.pop %v797
      %v799 = vmul.f32 %v720, 1.442695
      %v800 = vpow.pop %v799
      %v801 = vmul.f32 %v721, 1.442695
      %v802 = vpow.pop %v801
      %v803 = vmul.f32 %v722, 1.442695
      %v804 = vpow.pop %v803
      %v805 = vmul.f32 %v723, 1.442695
      %v806 = vpow.pop %v805
      %v807 = vmul.f32 %v724, 1.442695
      %v808 = vpow.pop %v807
      %v809 = vmul.f32 %v725, 1.442695
      %v810 = vpow.pop %v809
      %v811 = vmul.f32 %v726, 1.442695
      %v812 = vpow.pop %v811
      %v813 = vmul.f32 %v727, 1.442695
      %v814 = vpow.pop %v813
      %v815 = vmul.f32 %v728, 1.442695
      %v816 = vpow.pop %v815
      %v817 = vmul.f32 %v729, 1.442695
      %v818 = vpow.pop %v817
      %v819 = vmul.f32 %v730, 1.442695
      %v820 = vpow.pop %v819
      %v821 = vmul.f32 %v731, 1.442695
      %v822 = vpow.pop %v821
      %v823 = vmul.f32 %v732, 1.442695
      %v824 = vpow.pop %v823
      %v825 = vmul.f32 %v733, 1.442695
      %v826 = vpow.pop %v825
      %v827 = vmul.f32 %v734, 1.442695
      %v828 = vpow.pop %v827
      %v829 = vmul.f32 %v735, 1.442695
      %v830 = vpow.pop %v829
      %v831 = vmul.f32 %v736, 1.442695
      %v832 = vpow.pop %v831
      %v833 = vmul.f32 %v737, 1.442695
      %v834 = vpow.pop %v833
      %v835 = vmul.f32 %v738, 1.442695
      %v836 = vpow.pop %v835
      %v837 = vmul.f32 %v739, 1.442695
      %v838 = vpow.pop %v837
      %v839 = vmul.f32 %v740, 1.442695
      %v840 = vpow.pop %v839
      %v841 = vmul.f32 %v741, 1.442695
      %v842 = vpow.pop %v841
      %v843 = vmul.f32 %v742, 1.442695
      %v844 = vpow.pop %v843
      %v845 = vmul.f32 %v743, 1.442695
      %v846 = vpow.pop %v845
      %v847 = vmul.f32 %v744, 1.442695
      %v848 = vpow.pop %v847
      %v849 = vmul.f32 %v745, 1.442695
      %v850 = vpow.pop %v849
      %v851 = vmul.f32 %v746, 1.442695
      %v852 = vpow.pop %v851
      %v853 = vmul.f32 %v747, 1.442695
      %v854 = vpow.pop %v853
      %v855 = vmul.f32 %v748, 1.442695
      %v856 = vpow.pop %v855
      %v857 = vmul.f32 %v749, 1.442695
      %v858 = vpow.pop %v857
      %v859 = vmul.f32 %v750, 1.442695
      %v860 = vpow.pop %v859
      %v861 = vmul.f32 %v751, 1.442695
      %v862 = vpow.pop %v861
      %v863 = vmul.f32 %v752, 1.442695
      %v864 = vpow.pop %v863
      %v865 = vmul.f32 %v753, 1.442695
      %v866 = vpow.pop %v865
      %v867 = vmul.f32 %v754, 1.442695
      %v868 = vpow.pop %v867
      %v869 = vmul.f32 %v755, 1.442695
      %v870 = vpow.pop %v869
      %v871 = vmul.f32 %v756, 1.442695
      %v872 = vpow.pop %v871
      %v873 = vmul.f32 %v757, 1.442695
      %v874 = vpow.pop %v873
      %v875 = vmul.f32 %v758, 1.442695
      %v876 = vpow.pop %v875
      %v877 = vmul.f32 %v759, 1.442695
      %v878 = vpow.pop %v877
      %v879 = vmul.f32 %v760, 1.442695
      %v880 = vpow.pop %v879
      %v881 = vmul.f32 %v761, 1.442695
      %v882 = vpow.pop %v881
      %v883 = vmul.f32 %v762, 1.442695
      %v884 = vpow.pop %v883
      %v885 = vmul.f32 %v763, 1.442695
      %v886 = vpow.pop %v885
      %v887 = vmul.f32 %v764, 1.442695
      %v888 = vpow.pop %v887
      %v889 = vmul.f32 %v765, 1.442695
      %v890 = vpow.pop %v889
      %v891 = vmul.f32 %v766, 1.442695
      %v892 = vpow.pop %v891
      %v893 = vmul.f32 %v767, 1.442695
      %v894 = vpow.pop %v893
      %v895 = vmul.f32 %v768, 1.442695
      %v896 = vpow.pop %v895
      %v897 = vadd.f32 %v770, %v772
      %898 = vadd.xlane.f32.xlu0 %v897
      %v899 = vpop.xlane.xlu0 %898
      %v900 = vadd.f32 %v774, %v776
      %901 = vadd.xlane.f32.xlu0 %v900
      %v902 = vpop.xlane.xlu0 %901
      %v903 = vadd.f32 %v778, %v780
      %904 = vadd.xlane.f32.xlu0 %v903
      %v905 = vpop.xlane.xlu0 %904
      %v906 = vadd.f32 %v782, %v784
      %907 = vadd.xlane.f32.xlu0 %v906
      %v908 = vpop.xlane.xlu0 %907
      %v909 = vadd.f32 %v786, %v788
      %910 = vadd.xlane.f32.xlu0 %v909
      %v911 = vpop.xlane.xlu0 %910
      %v912 = vadd.f32 %v790, %v792
      %913 = vadd.xlane.f32.xlu0 %v912
      %v914 = vpop.xlane.xlu0 %913
      %v915 = vadd.f32 %v794, %v796
      %916 = vadd.xlane.f32.xlu0 %v915
      %v917 = vpop.xlane.xlu0 %916
      %v918 = vadd.f32 %v798, %v800
      %919 = vadd.xlane.f32.xlu0 %v918
      %v920 = vpop.xlane.xlu0 %919
      %v921 = vadd.f32 %v802, %v804
      %922 = vadd.xlane.f32.xlu0 %v921
      %v923 = vpop.xlane.xlu0 %922
      %v924 = vadd.f32 %v806, %v808
      %925 = vadd.xlane.f32.xlu0 %v924
      %v926 = vpop.xlane.xlu0 %925
      %v927 = vadd.f32 %v810, %v812
      %928 = vadd.xlane.f32.xlu0 %v927
      %v929 = vpop.xlane.xlu0 %928
      %v930 = vadd.f32 %v814, %v816
      %931 = vadd.xlane.f32.xlu0 %v930
      %v932 = vpop.xlane.xlu0 %931
      %v933 = vadd.f32 %v818, %v820
      %934 = vadd.xlane.f32.xlu0 %v933
      %v935 = vpop.xlane.xlu0 %934
      %v936 = vadd.f32 %v822, %v824
      %937 = vadd.xlane.f32.xlu0 %v936
      %v938 = vpop.xlane.xlu0 %937
      %v939 = vadd.f32 %v826, %v828
      %940 = vadd.xlane.f32.xlu0 %v939
      %v941 = vpop.xlane.xlu0 %940
      %v942 = vadd.f32 %v830, %v832
      %943 = vadd.xlane.f32.xlu0 %v942
      %v944 = vpop.xlane.xlu0 %943
      %v945 = vadd.f32 %v834, %v836
      %946 = vadd.xlane.f32.xlu0 %v945
      %v947 = vpop.xlane.xlu0 %946
      %v948 = vadd.f32 %v838, %v840
      %949 = vadd.xlane.f32.xlu0 %v948
      %v950 = vpop.xlane.xlu0 %949
      %v951 = vadd.f32 %v842, %v844
      %952 = vadd.xlane.f32.xlu0 %v951
      %v953 = vpop.xlane.xlu0 %952
      %v954 = vadd.f32 %v846, %v848
      %955 = vadd.xlane.f32.xlu0 %v954
      %v956 = vpop.xlane.xlu0 %955
      %v957 = vadd.f32 %v850, %v852
      %958 = vadd.xlane.f32.xlu0 %v957
      %v959 = vpop.xlane.xlu0 %958
      %v960 = vadd.f32 %v854, %v856
      %961 = vadd.xlane.f32.xlu0 %v960
      %v962 = vpop.xlane.xlu0 %961
      %v963 = vadd.f32 %v858, %v860
      %964 = vadd.xlane.f32.xlu0 %v963
      %v965 = vpop.xlane.xlu0 %964
      %v966 = vadd.f32 %v862, %v864
      %967 = vadd.xlane.f32.xlu0 %v966
      %v968 = vpop.xlane.xlu0 %967
      %v969 = vadd.f32 %v866, %v868
      %970 = vadd.xlane.f32.xlu0 %v969
      %v971 = vpop.xlane.xlu0 %970
      %v972 = vadd.f32 %v870, %v872
      %973 = vadd.xlane.f32.xlu0 %v972
      %v974 = vpop.xlane.xlu0 %973
      %v975 = vadd.f32 %v874, %v876
      %976 = vadd.xlane.f32.xlu0 %v975
      %v977 = vpop.xlane.xlu0 %976
      %v978 = vadd.f32 %v878, %v880
      %979 = vadd.xlane.f32.xlu0 %v978
      %v980 = vpop.xlane.xlu0 %979
      %v981 = vadd.f32 %v882, %v884
      %982 = vadd.xlane.f32.xlu0 %v981
      %v983 = vpop.xlane.xlu0 %982
      %v984 = vadd.f32 %v886, %v888
      %985 = vadd.xlane.f32.xlu0 %v984
      %v986 = vpop.xlane.xlu0 %985
      %v987 = vadd.f32 %v890, %v892
      %988 = vadd.xlane.f32.xlu0 %v987
      %v989 = vpop.xlane.xlu0 %988
      %v990 = vadd.f32 %v894, %v896
      %991 = vadd.xlane.f32.xlu0 %v990
      %v992 = vpop.xlane.xlu0 %991
      %v993 = vrcp.pop %v899
      %v994 = vrcp.pop %v902
      %v995 = vrcp.pop %v905
      %v996 = vrcp.pop %v908
      %v997 = vrcp.pop %v911
      %v998 = vrcp.pop %v914
      %v999 = vrcp.pop %v917
      %v1000 = vrcp.pop %v920
      %v1001 = vrcp.pop %v923
      %v1002 = vrcp.pop %v926
      %v1003 = vrcp.pop %v929
      %v1004 = vrcp.pop %v932
      %v1005 = vrcp.pop %v935
      %v1006 = vrcp.pop %v938
      %v1007 = vrcp.pop %v941
      %v1008 = vrcp.pop %v944
      %v1009 = vrcp.pop %v947
      %v1010 = vrcp.pop %v950
      %v1011 = vrcp.pop %v953
      %v1012 = vrcp.pop %v956
      %v1013 = vrcp.pop %v959
      %v1014 = vrcp.pop %v962
      %v1015 = vrcp.pop %v965
      %v1016 = vrcp.pop %v968
      %v1017 = vrcp.pop %v971
      %v1018 = vrcp.pop %v974
      %v1019 = vrcp.pop %v977
      %v1020 = vrcp.pop %v980
      %v1021 = vrcp.pop %v983
      %v1022 = vrcp.pop %v986
      %v1023 = vrcp.pop %v989
      %v1024 = vrcp.pop %v992
      %v1025 = vmul.f32 %v770, %v993
      %v1026 = vmul.f32 %v772, %v993
      %v1027 = vmul.f32 %v774, %v994
      %v1028 = vmul.f32 %v776, %v994
      %v1029 = vmul.f32 %v778, %v995
      %v1030 = vmul.f32 %v780, %v995
      %v1031 = vmul.f32 %v782, %v996
      %v1032 = vmul.f32 %v784, %v996
      %v1033 = vmul.f32 %v786, %v997
      %v1034 = vmul.f32 %v788, %v997
      %v1035 = vmul.f32 %v790, %v998
      %v1036 = vmul.f32 %v792, %v998
      %v1037 = vmul.f32 %v794, %v999
      %v1038 = vmul.f32 %v796, %v999
      %v1039 = vmul.f32 %v798, %v1000
      %v1040 = vmul.f32 %v800, %v1000
      %v1041 = vmul.f32 %v802, %v1001
      %v1042 = vmul.f32 %v804, %v1001
      %v1043 = vmul.f32 %v806, %v1002
      %v1044 = vmul.f32 %v808, %v1002
      %v1045 = vmul.f32 %v810, %v1003
      %v1046 = vmul.f32 %v812, %v1003
      %v1047 = vmul.f32 %v814, %v1004
      %v1048 = vmul.f32 %v816, %v1004
      %v1049 = vmul.f32 %v818, %v1005
      %v1050 = vmul.f32 %v820, %v1005
      %v1051 = vmul.f32 %v822, %v1006
      %v1052 = vmul.f32 %v824, %v1006
      %v1053 = vmul.f32 %v826, %v1007
      %v1054 = vmul.f32 %v828, %v1007
      %v1055 = vmul.f32 %v830, %v1008
      %v1056 = vmul.f32 %v832, %v1008
      %v1057 = vmul.f32 %v834, %v1009
      %v1058 = vmul.f32 %v836, %v1009
      %v1059 = vmul.f32 %v838, %v1010
      %v1060 = vmul.f32 %v840, %v1010
      %v1061 = vmul.f32 %v842, %v1011
      %v1062 = vmul.f32 %v844, %v1011
      %v1063 = vmul.f32 %v846, %v1012
      %v1064 = vmul.f32 %v848, %v1012
      %v1065 = vmul.f32 %v850, %v1013
      %v1066 = vmul.f32 %v852, %v1013
      %v1067 = vmul.f32 %v854, %v1014
      %v1068 = vmul.f32 %v856, %v1014
      %v1069 = vmul.f32 %v858, %v1015
      %v1070 = vmul.f32 %v860, %v1015
      %v1071 = vmul.f32 %v862, %v1016
      %v1072 = vmul.f32 %v864, %v1016
      %v1073 = vmul.f32 %v866, %v1017
      %v1074 = vmul.f32 %v868, %v1017
      %v1075 = vmul.f32 %v870, %v1018
      %v1076 = vmul.f32 %v872, %v1018
      %v1077 = vmul.f32 %v874, %v1019
      %v1078 = vmul.f32 %v876, %v1019
      %v1079 = vmul.f32 %v878, %v1020
      %v1080 = vmul.f32 %v880, %v1020
      %v1081 = vmul.f32 %v882, %v1021
      %v1082 = vmul.f32 %v884, %v1021
      %v1083 = vmul.f32 %v886, %v1022
      %v1084 = vmul.f32 %v888, %v1022
      %v1085 = vmul.f32 %v890, %v1023
      %v1086 = vmul.f32 %v892, %v1023
      %v1087 = vmul.f32 %v894, %v1024
      %v1088 = vmul.f32 %v896, %v1024
      %v1089 = vld [vmem:[%s292] sm:$0xff]
      %v1090 = vld [vmem:[%s292 + $0x8] sm:$0xff]
      %v1091 = vld [vmem:[%s292 + $0x10] sm:$0xff]
      %v1092 = vld [vmem:[%s292 + $0x18] sm:$0xff]
      %v1093 = vld [vmem:[%s292 + $0x20] sm:$0xff]
      %v1094 = vld [vmem:[%s292 + $0x28] sm:$0xff]
      %v1095 = vld [vmem:[%s292 + $0x30] sm:$0xff]
      %v1096 = vld [vmem:[%s292 + $0x38] sm:$0xff]
      %v1097 = vpack.c.bf16 %v1027, %v1025
      %v1098 = vpack.c.bf16 %v1028, %v1026
      %v1099 = vpack.c.bf16 %v1031, %v1029
      %v1100 = vpack.c.bf16 %v1032, %v1030
      %v1101 = vpack.c.bf16 %v1035, %v1033
      %v1102 = vpack.c.bf16 %v1036, %v1034
      %v1103 = vpack.c.bf16 %v1039, %v1037
      %v1104 = vpack.c.bf16 %v1040, %v1038
      %v1105 = vpack.c.bf16 %v1043, %v1041
      %v1106 = vpack.c.bf16 %v1044, %v1042
      %v1107 = vpack.c.bf16 %v1047, %v1045
      %v1108 = vpack.c.bf16 %v1048, %v1046
      %v1109 = vpack.c.bf16 %v1051, %v1049
      %v1110 = vpack.c.bf16 %v1052, %v1050
      %v1111 = vpack.c.bf16 %v1055, %v1053
      %v1112 = vpack.c.bf16 %v1056, %v1054
      %v1113 = vpack.c.bf16 %v1059, %v1057
      %v1114 = vpack.c.bf16 %v1060, %v1058
      %v1115 = vpack.c.bf16 %v1063, %v1061
      %v1116 = vpack.c.bf16 %v1064, %v1062
      %v1117 = vpack.c.bf16 %v1067, %v1065
      %v1118 = vpack.c.bf16 %v1068, %v1066
      %v1119 = vpack.c.bf16 %v1071, %v1069
      %v1120 = vpack.c.bf16 %v1072, %v1070
      %v1121 = vpack.c.bf16 %v1075, %v1073
      %v1122 = vpack.c.bf16 %v1076, %v1074
      %v1123 = vpack.c.bf16 %v1079, %v1077
      %v1124 = vpack.c.bf16 %v1080, %v1078
      %v1125 = vpack.c.bf16 %v1083, %v1081
      %v1126 = vpack.c.bf16 %v1084, %v1082
      %v1127 = vpack.c.bf16 %v1087, %v1085
      %v1128 = vpack.c.bf16 %v1088, %v1086
      %v1129 = vld [vmem:[%s301] sm:$0xff]
      %v1130 = vld [vmem:[%s301 + $0x8] sm:$0xff]
      %v1131 = vld [vmem:[%s301 + $0x10] sm:$0xff]
      %v1132 = vld [vmem:[%s301 + $0x18] sm:$0xff]
      %v1133 = vld [vmem:[%s301 + $0x20] sm:$0xff]
      %v1134 = vld [vmem:[%s301 + $0x28] sm:$0xff]
      %v1135 = vld [vmem:[%s301 + $0x30] sm:$0xff]
      %v1136 = vld [vmem:[%s301 + $0x38] sm:$0xff]
      %v1137 = vld [vmem:[%s301 + $0x40] sm:$0xff]
      %v1138 = vld [vmem:[%s301 + $0x48] sm:$0xff]
      %v1139 = vld [vmem:[%s301 + $0x50] sm:$0xff]
      %v1140 = vld [vmem:[%s301 + $0x58] sm:$0xff]
      %v1141 = vld [vmem:[%s301 + $0x60] sm:$0xff]
      %v1142 = vld [vmem:[%s301 + $0x68] sm:$0xff]
      %v1143 = vld [vmem:[%s301 + $0x70] sm:$0xff]
      %v1144 = vld [vmem:[%s301 + $0x78] sm:$0xff]
      %v1153 = vunpack.c.l.b16 %v1089
      %v1154 = vunpack.c.h.b16 %v1089
      %v1155 = vunpack.c.l.b16 %v1090
      %v1156 = vunpack.c.h.b16 %v1090
      %v1157 = vunpack.c.l.b16 %v1091
      %v1158 = vunpack.c.h.b16 %v1091
      %v1159 = vunpack.c.l.b16 %v1092
      %v1160 = vunpack.c.h.b16 %v1092
      %v1161 = vunpack.c.l.b16 %v1093
      %v1162 = vunpack.c.h.b16 %v1093
      %v1163 = vunpack.c.l.b16 %v1094
      %v1164 = vunpack.c.h.b16 %v1094
      %v1165 = vunpack.c.l.b16 %v1095
      %v1166 = vunpack.c.h.b16 %v1095
      %v1167 = vunpack.c.l.b16 %v1096
      %v1168 = vunpack.c.h.b16 %v1096
      %v1169 = vpack.c.b16 %v1155, %v1153
      %v1170 = vpack.c.b16 %v1156, %v1154
      %v1171 = vpack.c.b16 %v1159, %v1157
      %v1172 = vpack.c.b16 %v1160, %v1158
      %v1173 = vpack.c.b16 %v1163, %v1161
      %v1174 = vpack.c.b16 %v1164, %v1162
      %v1175 = vpack.c.b16 %v1167, %v1165
      %v1176 = vpack.c.b16 %v1168, %v1166
      %1185 = vmatprep.subr.bf16.mxu0 %v1112
      %1186 = vmatpush1.bf16.xpose.msra.mxu0 %v1111
      %1187 = vmatprep.subr.bf16.mxu0 %v1110
      %1188 = vmatpush1.bf16.xpose.msra.mxu0 %v1109
      %1189 = vmatprep.subr.bf16.mxu0 %v1108
      %1190 = vmatpush1.bf16.xpose.msra.mxu0 %v1107
      %1191 = vmatprep.subr.bf16.mxu0 %v1106
      %1192 = vmatpush1.bf16.xpose.msra.mxu0 %v1105
      %1193 = vmatprep.subr.bf16.mxu0 %v1104
      %1194 = vmatpush1.bf16.xpose.msra.mxu0 %v1103
      %1195 = vmatprep.subr.bf16.mxu0 %v1102
      %1196 = vmatpush1.bf16.xpose.msra.mxu0 %v1101
      %1197 = vmatprep.subr.bf16.mxu0 %v1100
      %1198 = vmatpush1.bf16.xpose.msra.mxu0 %v1099
      %1199 = vmatprep.subr.bf16.mxu0 %v1098
      %1200 = vmatpush1.bf16.xpose.msra.mxu0 %v1097
      %1201 = vmatprep.subr.bf16.mxu0 %v1128
      %1202 = vmatpush2.bf16.xpose.msra.mxu0 %v1127
      %1203 = vmatprep.subr.bf16.mxu0 %v1126
      %1204 = vmatpush2.bf16.xpose.msra.mxu0 %v1125
      %1205 = vmatprep.subr.bf16.mxu0 %v1124
      %1206 = vmatpush2.bf16.xpose.msra.mxu0 %v1123
      %1207 = vmatprep.subr.bf16.mxu0 %v1122
      %1208 = vmatpush2.bf16.xpose.msra.mxu0 %v1121
      %1209 = vmatprep.subr.bf16.mxu0 %v1120
      %1210 = vmatpush2.bf16.xpose.msra.mxu0 %v1119
      %1211 = vmatprep.subr.bf16.mxu0 %v1118
      %1212 = vmatpush2.bf16.xpose.msra.mxu0 %v1117
      %1213 = vmatprep.subr.bf16.mxu0 %v1116
      %1214 = vmatpush2.bf16.xpose.msra.mxu0 %v1115
      %1215 = vmatprep.subr.bf16.mxu0 %v1114
      %1216 = vmatpush2.bf16.xpose.msra.mxu0 %v1113
      %1217 = vmatprep.mubr.bf16.mxu0 %v1170
      %1218 = vmatmul.mubr.bf16.gmra.mxu0 %v1169
      %v1219 = vpop.f32.mrf.mxu0
      %v1220 = vadd.f32 %v1129, %v1219
      %v1221 = vpop.f32.mrf.mxu0
      %v1222 = vadd.f32 %v1130, %v1221
      %v1223 = vpop.f32.mrf.mxu0
      %v1224 = vadd.f32 %v1131, %v1223
      %v1225 = vpop.f32.mrf.mxu0
      %v1226 = vadd.f32 %v1132, %v1225
      %1227 = vmatprep.mubr.bf16.mxu0 %v1172
      %1228 = vmatmul.mubr.bf16.gmra.mxu0 %v1171
      %v1229 = vpop.f32.mrf.mxu0
      %v1230 = vadd.f32 %v1133, %v1229
      %v1231 = vpop.f32.mrf.mxu0
      %v1232 = vadd.f32 %v1134, %v1231
      %v1233 = vpop.f32.mrf.mxu0
      %v1234 = vadd.f32 %v1135, %v1233
      %v1235 = vpop.f32.mrf.mxu0
      %v1236 = vadd.f32 %v1136, %v1235
      %1237 = vmatprep.mubr.bf16.mxu0 %v1174
      %1238 = vmatmul.mubr.bf16.gmra.mxu0 %v1173
      %v1239 = vpop.f32.mrf.mxu0
      %v1240 = vadd.f32 %v1137, %v1239
      %v1241 = vpop.f32.mrf.mxu0
      %v1242 = vadd.f32 %v1138, %v1241
      %v1243 = vpop.f32.mrf.mxu0
      %v1244 = vadd.f32 %v1139, %v1243
      %v1245 = vpop.f32.mrf.mxu0
      %v1246 = vadd.f32 %v1140, %v1245
      %1247 = vmatprep.mubr.bf16.mxu0 %v1176
      %1248 = vmatmul.mubr.bf16.gmra.mxu0 %v1175
      %v1249 = vpop.f32.mrf.mxu0
      %v1250 = vadd.f32 %v1141, %v1249
      %v1251 = vpop.f32.mrf.mxu0
      %v1252 = vadd.f32 %v1142, %v1251
      %v1253 = vpop.f32.mrf.mxu0
      %v1254 = vadd.f32 %v1143, %v1253
      %v1255 = vpop.f32.mrf.mxu0
      %v1256 = vadd.f32 %v1144, %v1255
      %1257 = vdwg.mxu0
      %1258 = vst [vmem:[%s311] sm:$0xff] %v1220
      %1259 = vst [vmem:[%s311 + $0x8] sm:$0xff] %v1222
      %1260 = vst [vmem:[%s311 + $0x10] sm:$0xff] %v1224
      %1261 = vst [vmem:[%s311 + $0x18] sm:$0xff] %v1226
      %1262 = vst [vmem:[%s311 + $0x20] sm:$0xff] %v1230
      %1263 = vst [vmem:[%s311 + $0x28] sm:$0xff] %v1232
      %1264 = vst [vmem:[%s311 + $0x30] sm:$0xff] %v1234
      %1265 = vst [vmem:[%s311 + $0x38] sm:$0xff] %v1236
      %1266 = vst [vmem:[%s311 + $0x40] sm:$0xff] %v1240
      %1267 = vst [vmem:[%s311 + $0x48] sm:$0xff] %v1242
      %1268 = vst [vmem:[%s311 + $0x50] sm:$0xff] %v1244
      %1269 = vst [vmem:[%s311 + $0x58] sm:$0xff] %v1246
      %1270 = vst [vmem:[%s311 + $0x60] sm:$0xff] %v1250
      %1271 = vst [vmem:[%s311 + $0x68] sm:$0xff] %v1252
      %1272 = vst [vmem:[%s311 + $0x70] sm:$0xff] %v1254
      %1273 = vst [vmem:[%s311 + $0x78] sm:$0xff] %v1256
      %s1274 = smul.u32 2, %s20
      %p1275 = scmp.lt.s32.totalorder %s19, 1
      %s1276 = scalar_select %p1275, %s19, 1
      %p1277 = scmp.lt.s32.totalorder %s1274, 1
      %s1278 = scalar_select %p1277, %s1274, 1
      %s1279 = smul.addr %s1276, 16
      %s1280 = sadd.s32 %s1278, %s1279
      %s1281 = smul.addr %s1280, 8
      %s1282 = scalar_lea.vmem %s4, %s1281
      // Predicated region
      $region37: #{pam_forward.3} parent=35 // pred_check
        %p1283 = pneg %p155
      $region38: #{pam_forward.3} parent=35 // pred_check_branch
        %1285 = sbr.rel (%p1283) target = $region40
      $region39: #{pam_forward.3} parent=35 // pred_region
        %s1286 = smul.u32 2, %s20
      $region40: #{pam_forward.3} parent=35 // pred_fallthru
        _
    $region36: #{pam_forward.3} parent=5 // pred_fallthru
      _
    %p1287 = scmp.le.s32.totalorder 2, %s10
    // Predicated region
    $region41: #{pam_forward.3} parent=5 // pred_check
      %p1288 = pneg %p1287
    $region42: #{pam_forward.3} parent=5 // pred_check_branch
      %1290 = sbr.rel (%p1288) target = $region44
    $region43: #{pam_forward.3} parent=5 // pred_region
      %s1291 = ssub.s32 %s10, 2
      // Predicated region
      $region45: #{pam_forward.3} parent=43 // pred_check
        %p1292 = pneg %p161
      $region46: #{pam_forward.3} parent=43 // pred_check_branch
        %1294 = sbr.rel (%p1292) target = $region48
      $region47: #{pam_forward.3} parent=43 // pred_region
        %s1295 = smul.u32 2, %s22
        %p1296 = scmp.lt.s32.totalorder %s21, 1
        %s1297 = scalar_select %p1296, %s21, 1
        %p1298 = scmp.lt.s32.totalorder %s1295, 1
        %s1299 = scalar_select %p1298, %s1295, 1
        %s1300 = smul.addr %s1297, 16
        %s1301 = sadd.s32 %s1299, %s1300
        %s1302 = smul.addr %s1301, 8
        %s1303 = scalar_lea.vmem %s4, %s1302
      $region48: #{pam_forward.3} parent=43 // pred_fallthru
        _
    $region44: #{pam_forward.3} parent=5 // pred_fallthru
      _
  $region6: #{pam_forward.3} parent=0 // loop_footer
    %s14 = sadd.s32 1, %s10
  $region7: #{pam_forward.3} parent=0 // loop_footer_branch
    %9 = sbr.rel target = $region3
  $region8: #{pam_forward.3} parent=0 // loop_exit
    _

// kernel: pam_forward.2
$region0: #{pam_forward.2}
  #allocation0 [shape = 'u32[]', space=smem, size = 0x4, offset = 0x4, fixed_abs, tag = 'smem constant byte address 0x4 - core index']
  #allocation1 [shape = 'u32[144,128]{1,0:T(1,128)}', space=vmem, size = 0x12000, scoped, tag = 'internal scratch']
  %s0 = inlined_call_operand.vmem [shape: f32[2,64,256], index: 0, kind: input, shape index: {}]
  %s1 = inlined_call_operand.vmem [shape: bf16[8,64], index: 1, kind: input, shape index: {}]
  %s2 = inlined_call_operand.vmem [shape: bf16[8,64], index: 2, kind: input, shape index: {}]
  %s3 = inlined_call_operand.vmem [shape: bf16[64,64], index: 3, kind: input, shape index: {}]
  %s4 = inlined_call_operand.vmem [shape: f32[8,1], index: 4, kind: input, shape index: {}]
  %s5 = inlined_call_operand.vmem [shape: f32[8,1], index: 5, kind: input, shape index: {}]
  %s6 = inlined_call_operand.vmem [shape: f32[64,1], index: 6, kind: input, shape index: {}]
  %s7 = inlined_call_operand.vmem [shape: bf16[2,8,256], index: 7, kind: output, shape index: {0}]
  %s8 = inlined_call_operand.vmem [shape: bf16[2,8,256], index: 8, kind: output, shape index: {1}]
  %s9 = inlined_call_operand.vmem [shape: bf16[2,64,256], index: 9, kind: output, shape index: {2}]
  %10 = xla_tuple %s7, %s8, %s9
  %s11 = sld [smem:[#allocation0]]
  $region77: #{pam_forward.2} parent=0
    _
  %s13 = ssub.s32 1, %s11
  %s14 = scalar_select 0, %s13, %s11
  loop: start=0, step=1, limit=4
  $region2: #{pam_forward.2} parent=0 // loop_pre_header
    _
  $region3: #{pam_forward.2} parent=0 // loop_header
    %s16 = sphi 0, %s20
    %p17 = scmp.ge.s32.totalorder %s16, 4
    %s23 = sphi 0, %s35
    %s24 = sphi 0, %s31
    %s25 = sphi 0, %s23
    %s26 = sphi 0, %s24
    %s27 = sphi 0, %s25
    %s28 = sphi 0, %s26
    %s40 = sphi 0, %s42
    %s43 = sphi 0, %s40
    %s44 = sphi 0, %s43
    %s60 = sphi 0, %s44
    %s64 = sphi 0, %s64
    %s66 = sphi 0, %s64
    %s67 = sphi 0, %s66
    %s81 = sphi 0, %s67
    %s85 = sphi 0, %s85
    %s87 = sphi 0, %s85
    %s88 = sphi 0, %s87
    %s102 = sphi 0, %s88
    %s106 = sphi 0, %s106
    %s108 = sphi 0, %s106
    %s109 = sphi 0, %s108
    %s123 = sphi 0, %s109
    %s127 = sphi 0, %s127
    %s129 = sphi 0, %s127
    %s130 = sphi 0, %s129
    %s144 = sphi 0, %s130
    %s148 = sphi 0, %s148
    %s150 = sphi 0, %s148
    %s151 = sphi 0, %s150
    %s165 = sphi 0, %s151
    %s169 = sphi 0, %s169
    %s171 = sphi 0, %s169
    %s172 = sphi 0, %s171
    %s186 = sphi 0, %s172
    %s194 = sphi 0, %s196
    %s197 = sphi 0, %s194
    %s198 = sphi 0, %s197
    %s214 = sphi 0, %s198
    %s222 = sphi 0, %s224
    %s225 = sphi 0, %s222
    %s226 = sphi 0, %s225
    %s242 = sphi 0, %s226
    %s250 = sphi 0, %s252
    %s253 = sphi 0, %s250
    %s254 = sphi 0, %s253
    %s270 = sphi 0, %s254
  $region4: #{pam_forward.2} parent=0 // loop_header_branch
    %19 = sbr.rel (%p17) target = $region8
  $region5: #{pam_forward.2} parent=0 // loop_body
    %s21 = ssub.s32 %s16, 1
    %s22 = ssub.s32 %s16, 2
    %s29 = sadd.s32 1, %s24
    %p30 = scmp.ge.s32.totalorder %s29, 1
    %s31 = scalar_select %p30, 0, %s29
    %s32 = sadd.s32 1, %s23
    %s33 = scalar_select %p30, %s32, %s23
    %p34 = scmp.ge.s32.totalorder %s33, 2
    %s35 = scalar_select %p34, 0, %s33
    %s36 = ssub.s32 %s23, %s35
    %s37 = ssub.s32 %s24, %s31
    %s38 = sor.u32 %s36, %s37
    %p39 = scmp.eq.s32.totalorder %s38, 0
    %s41 = sadd.s32 %s40, 1
    %s42 = scalar_select %p39, %s40, %s41
    %p45 = pneg %p39
    %p46 = scmp.eq.s32.totalorder %s16, 1
    %p47 = por %p45, %p46
    %p48 = scmp.ne.s32.totalorder %s40, %s43
    %p49 = scmp.eq.s32.totalorder %s16, 0
    %p50 = por %p48, %p49
    %p51 = scmp.ne.s32.totalorder %s40, %s43
    %p52 = scmp.eq.s32.totalorder %s21, 1
    %p53 = por %p51, %p52
    %p54 = scmp.ne.s32.totalorder %s43, %s44
    %p55 = scmp.eq.s32.totalorder %s21, 0
    %p56 = por %p54, %p55
    %p57 = scmp.ne.s32.totalorder %s43, %s44
    %p58 = scmp.eq.s32.totalorder %s22, 1
    %p59 = por %p57, %p58
    %p61 = scmp.ne.s32.totalorder %s44, %s60
    %p62 = scmp.eq.s32.totalorder %s22, 0
    %p63 = por %p61, %p62
    %s65 = sadd.s32 %s64, 1
    %p68 = scmp.eq.s32.totalorder %s16, 1
    %p69 = scmp.ne.s32.totalorder %s64, %s66
    %p70 = scmp.eq.s32.totalorder %s16, 0
    %p71 = por %p69, %p70
    %p72 = scmp.ne.s32.totalorder %s64, %s66
    %p73 = scmp.eq.s32.totalorder %s21, 1
    %p74 = por %p72, %p73
    %p75 = scmp.ne.s32.totalorder %s66, %s67
    %p76 = scmp.eq.s32.totalorder %s21, 0
    %p77 = por %p75, %p76
    %p78 = scmp.ne.s32.totalorder %s66, %s67
    %p79 = scmp.eq.s32.totalorder %s22, 1
    %p80 = por %p78, %p79
    %p82 = scmp.ne.s32.totalorder %s67, %s81
    %p83 = scmp.eq.s32.totalorder %s22, 0
    %p84 = por %p82, %p83
    %s86 = sadd.s32 %s85, 1
    %p89 = scmp.eq.s32.totalorder %s16, 1
    %p90 = scmp.ne.s32.totalorder %s85, %s87
    %p91 = scmp.eq.s32.totalorder %s16, 0
    %p92 = por %p90, %p91
    %p93 = scmp.ne.s32.totalorder %s85, %s87
    %p94 = scmp.eq.s32.totalorder %s21, 1
    %p95 = por %p93, %p94
    %p96 = scmp.ne.s32.totalorder %s87, %s88
    %p97 = scmp.eq.s32.totalorder %s21, 0
    %p98 = por %p96, %p97
    %p99 = scmp.ne.s32.totalorder %s87, %s88
    %p100 = scmp.eq.s32.totalorder %s22, 1
    %p101 = por %p99, %p100
    %p103 = scmp.ne.s32.totalorder %s88, %s102
    %p104 = scmp.eq.s32.totalorder %s22, 0
    %p105 = por %p103, %p104
    %s107 = sadd.s32 %s106, 1
    %p110 = scmp.eq.s32.totalorder %s16, 1
    %p111 = scmp.ne.s32.totalorder %s106, %s108
    %p112 = scmp.eq.s32.totalorder %s16, 0
    %p113 = por %p111, %p112
    %p114 = scmp.ne.s32.totalorder %s106, %s108
    %p115 = scmp.eq.s32.totalorder %s21, 1
    %p116 = por %p114, %p115
    %p117 = scmp.ne.s32.totalorder %s108, %s109
    %p118 = scmp.eq.s32.totalorder %s21, 0
    %p119 = por %p117, %p118
    %p120 = scmp.ne.s32.totalorder %s108, %s109
    %p121 = scmp.eq.s32.totalorder %s22, 1
    %p122 = por %p120, %p121
    %p124 = scmp.ne.s32.totalorder %s109, %s123
    %p125 = scmp.eq.s32.totalorder %s22, 0
    %p126 = por %p124, %p125
    %s128 = sadd.s32 %s127, 1
    %p131 = scmp.eq.s32.totalorder %s16, 1
    %p132 = scmp.ne.s32.totalorder %s127, %s129
    %p133 = scmp.eq.s32.totalorder %s16, 0
    %p134 = por %p132, %p133
    %p135 = scmp.ne.s32.totalorder %s127, %s129
    %p136 = scmp.eq.s32.totalorder %s21, 1
    %p137 = por %p135, %p136
    %p138 = scmp.ne.s32.totalorder %s129, %s130
    %p139 = scmp.eq.s32.totalorder %s21, 0
    %p140 = por %p138, %p139
    %p141 = scmp.ne.s32.totalorder %s129, %s130
    %p142 = scmp.eq.s32.totalorder %s22, 1
    %p143 = por %p141, %p142
    %p145 = scmp.ne.s32.totalorder %s130, %s144
    %p146 = scmp.eq.s32.totalorder %s22, 0
    %p147 = por %p145, %p146
    %s149 = sadd.s32 %s148, 1
    %p152 = scmp.eq.s32.totalorder %s16, 1
    %p153 = scmp.ne.s32.totalorder %s148, %s150
    %p154 = scmp.eq.s32.totalorder %s16, 0
    %p155 = por %p153, %p154
    %p156 = scmp.ne.s32.totalorder %s148, %s150
    %p157 = scmp.eq.s32.totalorder %s21, 1
    %p158 = por %p156, %p157
    %p159 = scmp.ne.s32.totalorder %s150, %s151
    %p160 = scmp.eq.s32.totalorder %s21, 0
    %p161 = por %p159, %p160
    %p162 = scmp.ne.s32.totalorder %s150, %s151
    %p163 = scmp.eq.s32.totalorder %s22, 1
    %p164 = por %p162, %p163
    %p166 = scmp.ne.s32.totalorder %s151, %s165
    %p167 = scmp.eq.s32.totalorder %s22, 0
    %p168 = por %p166, %p167
    %s170 = sadd.s32 %s169, 1
    %p173 = scmp.eq.s32.totalorder %s16, 1
    %p174 = scmp.ne.s32.totalorder %s169, %s171
    %p175 = scmp.eq.s32.totalorder %s16, 0
    %p176 = por %p174, %p175
    %p177 = scmp.ne.s32.totalorder %s169, %s171
    %p178 = scmp.eq.s32.totalorder %s21, 1
    %p179 = por %p177, %p178
    %p180 = scmp.ne.s32.totalorder %s171, %s172
    %p181 = scmp.eq.s32.totalorder %s21, 0
    %p182 = por %p180, %p181
    %p183 = scmp.ne.s32.totalorder %s171, %s172
    %p184 = scmp.eq.s32.totalorder %s22, 1
    %p185 = por %p183, %p184
    %p187 = scmp.ne.s32.totalorder %s172, %s186
    %p188 = scmp.eq.s32.totalorder %s22, 0
    %p189 = por %p187, %p188
    %s190 = ssub.s32 %s23, %s35
    %s191 = ssub.s32 %s24, %s31
    %s192 = sor.u32 %s190, %s191
    %p193 = scmp.eq.s32.totalorder %s192, 0
    %s195 = sadd.s32 %s194, 1
    %s196 = scalar_select %p193, %s194, %s195
    %p199 = pneg %p193
    %p200 = scmp.eq.s32.totalorder %s16, 1
    %p201 = por %p199, %p200
    %p202 = scmp.ne.s32.totalorder %s194, %s197
    %p203 = scmp.eq.s32.totalorder %s16, 0
    %p204 = por %p202, %p203
    %p205 = scmp.ne.s32.totalorder %s194, %s197
    %p206 = scmp.eq.s32.totalorder %s21, 1
    %p207 = por %p205, %p206
    %p208 = scmp.ne.s32.totalorder %s197, %s198
    %p209 = scmp.eq.s32.totalorder %s21, 0
    %p210 = por %p208, %p209
    %p211 = scmp.ne.s32.totalorder %s197, %s198
    %p212 = scmp.eq.s32.totalorder %s22, 1
    %p213 = por %p211, %p212
    %p215 = scmp.ne.s32.totalorder %s198, %s214
    %p216 = scmp.eq.s32.totalorder %s22, 0
    %p217 = por %p215, %p216
    %s218 = ssub.s32 %s23, %s35
    %s219 = ssub.s32 %s24, %s31
    %s220 = sor.u32 %s218, %s219
    %p221 = scmp.eq.s32.totalorder %s220, 0
    %s223 = sadd.s32 %s222, 1
    %s224 = scalar_select %p221, %s222, %s223
    %p227 = pneg %p221
    %p228 = scmp.eq.s32.totalorder %s16, 1
    %p229 = por %p227, %p228
    %p230 = scmp.ne.s32.totalorder %s222, %s225
    %p231 = scmp.eq.s32.totalorder %s16, 0
    %p232 = por %p230, %p231
    %p233 = scmp.ne.s32.totalorder %s222, %s225
    %p234 = scmp.eq.s32.totalorder %s21, 1
    %p235 = por %p233, %p234
    %p236 = scmp.ne.s32.totalorder %s225, %s226
    %p237 = scmp.eq.s32.totalorder %s21, 0
    %p238 = por %p236, %p237
    %p239 = scmp.ne.s32.totalorder %s225, %s226
    %p240 = scmp.eq.s32.totalorder %s22, 1
    %p241 = por %p239, %p240
    %p243 = scmp.ne.s32.totalorder %s226, %s242
    %p244 = scmp.eq.s32.totalorder %s22, 0
    %p245 = por %p243, %p244
    %s246 = ssub.s32 %s23, %s35
    %s247 = ssub.s32 %s24, %s31
    %s248 = sor.u32 %s246, %s247
    %p249 = scmp.eq.s32.totalorder %s248, 0
    %s251 = sadd.s32 %s250, 1
    %s252 = scalar_select %p249, %s250, %s251
    %p255 = pneg %p249
    %p256 = scmp.eq.s32.totalorder %s16, 1
    %p257 = por %p255, %p256
    %p258 = scmp.ne.s32.totalorder %s250, %s253
    %p259 = scmp.eq.s32.totalorder %s16, 0
    %p260 = por %p258, %p259
    %p261 = scmp.ne.s32.totalorder %s250, %s253
    %p262 = scmp.eq.s32.totalorder %s21, 1
    %p263 = por %p261, %p262
    %p264 = scmp.ne.s32.totalorder %s253, %s254
    %p265 = scmp.eq.s32.totalorder %s21, 0
    %p266 = por %p264, %p265
    %p267 = scmp.ne.s32.totalorder %s253, %s254
    %p268 = scmp.eq.s32.totalorder %s22, 1
    %p269 = por %p267, %p268
    %p271 = scmp.ne.s32.totalorder %s254, %s270
    %p272 = scmp.eq.s32.totalorder %s22, 0
    %p273 = por %p271, %p272
    %p274 = scmp.le.s32.totalorder 1, %s16
    %p275 = scmp.lt.s32.totalorder %s16, 3
    %p276 = pnand %p274, %p275
    %p277 = pneg %p276
    // Predicated region
    $region9: #{pam_forward.2} parent=5 // pred_check
      _
    $region10: #{pam_forward.2} parent=5 // pred_check_branch
      %279 = sbr.rel (%p276) target = $region12
    $region11: #{pam_forward.2} parent=5 // pred_region
      %s280 = ssub.s32 %s16, 1
      // Predicated region
      $region13: #{pam_forward.2} parent=11 // pred_check
        %p281 = pneg %p77
      $region14: #{pam_forward.2} parent=11 // pred_check_branch
        %283 = sbr.rel (%p281) target = $region16
      $region15: #{pam_forward.2} parent=11 // pred_region
        _
      $region16: #{pam_forward.2} parent=11 // pred_fallthru
        _
      // Predicated region
      $region17: #{pam_forward.2} parent=11 // pred_check
        %p284 = pneg %p98
      $region18: #{pam_forward.2} parent=11 // pred_check_branch
        %286 = sbr.rel (%p284) target = $region20
      $region19: #{pam_forward.2} parent=11 // pred_region
        _
      $region20: #{pam_forward.2} parent=11 // pred_fallthru
        _
      // Predicated region
      $region21: #{pam_forward.2} parent=11 // pred_check
        %p287 = pneg %p119
      $region22: #{pam_forward.2} parent=11 // pred_check_branch
        %289 = sbr.rel (%p287) target = $region24
      $region23: #{pam_forward.2} parent=11 // pred_region
        _
      $region24: #{pam_forward.2} parent=11 // pred_fallthru
        _
      // Predicated region
      $region25: #{pam_forward.2} parent=11 // pred_check
        %p290 = pneg %p140
      $region26: #{pam_forward.2} parent=11 // pred_check_branch
        %292 = sbr.rel (%p290) target = $region28
      $region27: #{pam_forward.2} parent=11 // pred_region
        _
      $region28: #{pam_forward.2} parent=11 // pred_fallthru
        _
      // Predicated region
      $region29: #{pam_forward.2} parent=11 // pred_check
        %p293 = pneg %p161
      $region30: #{pam_forward.2} parent=11 // pred_check_branch
        %295 = sbr.rel (%p293) target = $region32
      $region31: #{pam_forward.2} parent=11 // pred_region
        _
      $region32: #{pam_forward.2} parent=11 // pred_fallthru
        _
      // Predicated region
      $region33: #{pam_forward.2} parent=11 // pred_check
        %p296 = pneg %p182
      $region34: #{pam_forward.2} parent=11 // pred_check_branch
        %298 = sbr.rel (%p296) target = $region36
      $region35: #{pam_forward.2} parent=11 // pred_region
        _
      $region36: #{pam_forward.2} parent=11 // pred_fallthru
        _
    $region12: #{pam_forward.2} parent=5 // pred_fallthru
      _
    %p299 = scmp.lt.s32.totalorder %s16, 2
    // Predicated region
    $region37: #{pam_forward.2} parent=5 // pred_check
      %p300 = pneg %p299
    $region38: #{pam_forward.2} parent=5 // pred_check_branch
      %302 = sbr.rel (%p300) target = $region40
    $region39: #{pam_forward.2} parent=5 // pred_region
      // Predicated region
      $region41: #{pam_forward.2} parent=39 // pred_check
        %p303 = pneg %p50
      $region42: #{pam_forward.2} parent=39 // pred_check_branch
        %305 = sbr.rel (%p303) target = $region44
      $region43: #{pam_forward.2} parent=39 // pred_region
        %s306 = smul.u32 2, %s24
        %p307 = scmp.lt.s32.totalorder %s23, 1
        %s308 = scalar_select %p307, %s23, 1
        %p309 = scmp.lt.s32.totalorder %s306, 1
        %s310 = scalar_select %p309, %s306, 1
        %s311 = smul.addr %s308, 16
        %s312 = sadd.s32 %s310, %s311
        %s313 = smul.addr %s312, 8
        %s314 = scalar_lea.vmem %s0, %s313
        %s315 = smul.u32 2, %s24
      $region44: #{pam_forward.2} parent=39 // pred_fallthru
        _
    $region40: #{pam_forward.2} parent=5 // pred_fallthru
      _
    %p316 = scmp.le.s32.totalorder 1, %s16
    %p317 = scmp.lt.s32.totalorder %s16, 3
    %p318 = pnand %p316, %p317
    %p319 = pneg %p318
    // Predicated region
    $region45: #{pam_forward.2} parent=5 // pred_check
      _
    $region46: #{pam_forward.2} parent=5 // pred_check_branch
      %321 = sbr.rel (%p318) target = $region48
    $region47: #{pam_forward.2} parent=5 // pred_region
      %s322 = ssub.s32 %s16, 1
      %s323 = smul.u32 2, %s26
      %p324 = scmp.lt.s32.totalorder %s25, 1
      %s325 = scalar_select %p324, %s25, 1
      %p326 = scmp.lt.s32.totalorder %s323, 1
      %s327 = scalar_select %p326, %s323, 1
      %s328 = smul.addr %s325, 16
      %s329 = sadd.s32 %s327, %s328
      %s330 = smul.addr %s329, 8
      %s331 = scalar_lea.vmem %s0, %s330
      %p332 = pneg %p56
      %p333 = pneg %p53
      %p334 = pneg %p77
      %p335 = pneg %p74
      %p336 = pneg %p98
      %p337 = pneg %p95
      %p338 = pneg %p119
      %p339 = pneg %p116
      %p340 = pneg %p140
      %p341 = pneg %p137
      %p342 = pneg %p161
      %p343 = pneg %p158
      %p344 = pneg %p182
      %p345 = pneg %p179
      %p346 = pneg %p210
      %p347 = pneg %p207
      %s348 = smul.u32 2, %s26
      %p349 = scmp.lt.s32.totalorder %s25, 1
      %s350 = scalar_select %p349, %s25, 1
      %p351 = scmp.lt.s32.totalorder %s348, 1
      %s352 = scalar_select %p351, %s348, 1
      %s353 = smul.addr %s350, 2
      %s354 = sadd.s32 %s352, %s353
      %s355 = smul.addr %s354, 4
      %s356 = scalar_lea.vmem %s7, %s355
      %p357 = pneg %p238
      %p358 = pneg %p235
      %s359 = smul.u32 2, %s26
      %p360 = scmp.lt.s32.totalorder %s25, 1
      %s361 = scalar_select %p360, %s25, 1
      %p362 = scmp.lt.s32.totalorder %s359, 1
      %s363 = scalar_select %p362, %s359, 1
      %s364 = smul.addr %s361, 2
      %s365 = sadd.s32 %s363, %s364
      %s366 = smul.addr %s365, 4
      %s367 = scalar_lea.vmem %s8, %s366
      %p368 = pneg %p266
      %p369 = pneg %p263
      %s370 = smul.u32 2, %s26
      %p371 = scmp.lt.s32.totalorder %s25, 1
      %s372 = scalar_select %p371, %s25, 1
      %p373 = scmp.lt.s32.totalorder %s370, 1
      %s374 = scalar_select %p373, %s370, 1
      %s375 = smul.addr %s372, 16
      %s376 = sadd.s32 %s374, %s375
      %s377 = smul.addr %s376, 4
      %s378 = scalar_lea.vmem %s9, %s377
      %s379 = smul.u32 2, %s26
      %p380 = scmp.lt.s32.totalorder %s25, 1
      %s381 = scalar_select %p380, %s25, 1
      %p382 = scmp.lt.s32.totalorder %s379, 1
      %s383 = scalar_select %p382, %s379, 1
      %s384 = smul.addr %s381, 16
      %s385 = sadd.s32 %s383, %s384
      %s386 = smul.addr %s385, 8
      %s387 = scalar_lea.vmem %s0, %s386
      %s388 = smul.u32 2, %s26
      %s389 = smul.u32 2, %s26
      %p390 = scmp.lt.s32.totalorder %s25, 1
      %s391 = scalar_select %p390, %s25, 1
      %p392 = scmp.lt.s32.totalorder %s389, 1
      %s393 = scalar_select %p392, %s389, 1
      %s394 = smul.addr %s391, 2
      %s395 = sadd.s32 %s393, %s394
      %s396 = smul.addr %s395, 4
      %s397 = scalar_lea.vmem %s7, %s396
      %s398 = smul.u32 2, %s26
      %s399 = smul.u32 2, %s26
      %p400 = scmp.lt.s32.totalorder %s25, 1
      %s401 = scalar_select %p400, %s25, 1
      %p402 = scmp.lt.s32.totalorder %s399, 1
      %s403 = scalar_select %p402, %s399, 1
      %s404 = smul.addr %s401, 2
      %s405 = sadd.s32 %s403, %s404
      %s406 = smul.addr %s405, 4
      %s407 = scalar_lea.vmem %s8, %s406
      %s408 = smul.u32 2, %s26
      %s409 = smul.u32 2, %s26
      %p410 = scmp.lt.s32.totalorder %s25, 1
      %s411 = scalar_select %p410, %s25, 1
      %p412 = scmp.lt.s32.totalorder %s409, 1
      %s413 = scalar_select %p412, %s409, 1
      %s414 = smul.addr %s411, 16
      %s415 = sadd.s32 %s413, %s414
      %s416 = smul.addr %s415, 4
      %s417 = scalar_lea.vmem %s9, %s416
      %s418 = smul.u32 2, %s26
      %v420 = vld [vmem:[%s387] sm:$0xff]
      %v421 = vld [vmem:[%s387 + $0x8] sm:$0xff]
      %v422 = vld [vmem:[%s387 + $0x10] sm:$0xff]
      %v423 = vld [vmem:[%s387 + $0x18] sm:$0xff]
      %v424 = vld [vmem:[%s387 + $0x20] sm:$0xff]
      %v425 = vld [vmem:[%s387 + $0x28] sm:$0xff]
      %v426 = vld [vmem:[%s387 + $0x30] sm:$0xff]
      %v427 = vld [vmem:[%s387 + $0x38] sm:$0xff]
      %v428 = vld [vmem:[%s387 + $0x40] sm:$0xff]
      %v429 = vld [vmem:[%s387 + $0x48] sm:$0xff]
      %v430 = vld [vmem:[%s387 + $0x50] sm:$0xff]
      %v431 = vld [vmem:[%s387 + $0x58] sm:$0xff]
      %v432 = vld [vmem:[%s387 + $0x60] sm:$0xff]
      %v433 = vld [vmem:[%s387 + $0x68] sm:$0xff]
      %v434 = vld [vmem:[%s387 + $0x70] sm:$0xff]
      %v435 = vld [vmem:[%s387 + $0x78] sm:$0xff]
      %v436 = vpack.c.bf16 %v422, %v420
      %v437 = vpack.c.bf16 %v423, %v421
      %v438 = vpack.c.bf16 %v426, %v424
      %v439 = vpack.c.bf16 %v427, %v425
      %v440 = vpack.c.bf16 %v430, %v428
      %v441 = vpack.c.bf16 %v431, %v429
      %v442 = vpack.c.bf16 %v434, %v432
      %v443 = vpack.c.bf16 %v435, %v433
      %v444 = vld [vmem:[%s1] sm:$0xf]
      %v445 = vld [vmem:[%s4] sm:$0xff]
      %447 = vset.pattern.permute.xlu0 0
      %448 = vperm.xlu0 %447, %v445
      %v449 = vpop.permute.xlu0 %448
      %vm451 = vcmask 523264
      %v453 = vsel %vm451, %v444, 0
      %455 = vmatprep.subr.bf16.mxu0 0
      %456 = vmatpush1.bf16.msra.mxu0 0
      %457 = vmatprep.subr.bf16.mxu0 0
      %458 = vmatpush1.bf16.msra.mxu0 0
      %459 = vmatprep.subr.bf16.mxu0 0
      %460 = vmatpush1.bf16.msra.mxu0 0
      %461 = vmatprep.subr.bf16.mxu0 0
      %462 = vmatpush1.bf16.msra.mxu0 0
      %463 = vmatprep.subr.bf16.mxu0 %v443
      %464 = vmatpush1.bf16.msra.mxu0 %v442
      %465 = vmatprep.subr.bf16.mxu0 %v441
      %466 = vmatpush1.bf16.msra.mxu0 %v440
      %467 = vmatprep.subr.bf16.mxu0 %v439
      %468 = vmatpush1.bf16.msra.mxu0 %v438
      %469 = vmatprep.subr.bf16.mxu0 %v437
      %470 = vmatpush1.bf16.msra.mxu0 %v436
      %471 = vmatprep.subr.bf16.mxu0 0
      %472 = vmatpush2.bf16.msra.mxu0 0
      %473 = vmatprep.subr.bf16.mxu0 0
      %474 = vmatpush2.bf16.msra.mxu0 0
      %475 = vmatprep.subr.bf16.mxu0 0
      %476 = vmatpush2.bf16.msra.mxu0 0
      %477 = vmatprep.subr.bf16.mxu0 0
      %478 = vmatpush2.bf16.msra.mxu0 0
      %479 = vmatprep.subr.bf16.mxu0 0
      %480 = vmatpush2.bf16.msra.mxu0 0
      %481 = vmatprep.subr.bf16.mxu0 0
      %482 = vmatpush2.bf16.msra.mxu0 0
      %483 = vmatprep.subr.bf16.mxu0 0
      %484 = vmatpush2.bf16.msra.mxu0 0
      %485 = vmatprep.subr.bf16.mxu0 0
      %486 = vmatpush2.bf16.msra.mxu0 0
      %487 = vmatprep.mubr.bf16.mxu0 0
      %488 = vmatmul.mubr.bf16.gmra.mxu0 %v453
      %v489 = vpop.f32.mrf.mxu0
      %v490 = vadd.f32 %v449, %v489
      %v491 = vpop.f32.mrf.mxu0
      %v492 = vadd.f32 %v449, %v491
      %v493 = vpop.f32.mrf.mxu0
      %v494 = vpop.f32.mrf.mxu0
      %495 = vdwg.mxu0
      %v496 = vld [vmem:[%s2] sm:$0xf]
      %v497 = vld [vmem:[%s5] sm:$0xff]
      %499 = vset.pattern.permute.xlu0 0
      %500 = vperm.xlu0 %499, %v497
      %v501 = vpop.permute.xlu0 %500
      %v504 = vsel %vm451, %v496, 0
      %506 = vmatprep.subr.bf16.mxu0 0
      %507 = vmatpush1.bf16.msra.mxu0 0
      %508 = vmatprep.subr.bf16.mxu0 0
      %509 = vmatpush1.bf16.msra.mxu0 0
      %510 = vmatprep.subr.bf16.mxu0 0
      %511 = vmatpush1.bf16.msra.mxu0 0
      %512 = vmatprep.subr.bf16.mxu0 0
      %513 = vmatpush1.bf16.msra.mxu0 0
      %514 = vmatprep.subr.bf16.mxu0 %v443
      %515 = vmatpush1.bf16.msra.mxu0 %v442
      %516 = vmatprep.subr.bf16.mxu0 %v441
      %517 = vmatpush1.bf16.msra.mxu0 %v440
      %518 = vmatprep.subr.bf16.mxu0 %v439
      %519 = vmatpush1.bf16.msra.mxu0 %v438
      %520 = vmatprep.subr.bf16.mxu0 %v437
      %521 = vmatpush1.bf16.msra.mxu0 %v436
      %522 = vmatprep.subr.bf16.mxu0 0
      %523 = vmatpush2.bf16.msra.mxu0 0
      %524 = vmatprep.subr.bf16.mxu0 0
      %525 = vmatpush2.bf16.msra.mxu0 0
      %526 = vmatprep.subr.bf16.mxu0 0
      %527 = vmatpush2.bf16.msra.mxu0 0
      %528 = vmatprep.subr.bf16.mxu0 0
      %529 = vmatpush2.bf16.msra.mxu0 0
      %530 = vmatprep.subr.bf16.mxu0 0
      %531 = vmatpush2.bf16.msra.mxu0 0
      %532 = vmatprep.subr.bf16.mxu0 0
      %533 = vmatpush2.bf16.msra.mxu0 0
      %534 = vmatprep.subr.bf16.mxu0 0
      %535 = vmatpush2.bf16.msra.mxu0 0
      %536 = vmatprep.subr.bf16.mxu0 0
      %537 = vmatpush2.bf16.msra.mxu0 0
      %538 = vmatprep.mubr.bf16.mxu0 0
      %539 = vmatmul.mubr.bf16.gmra.mxu0 %v504
      %v540 = vpop.f32.mrf.mxu0
      %v541 = vadd.f32 %v501, %v540
      %v542 = vpop.f32.mrf.mxu0
      %v543 = vadd.f32 %v501, %v542
      %v544 = vpop.f32.mrf.mxu0
      %v545 = vpop.f32.mrf.mxu0
      %546 = vdwg.mxu0
      %v547 = vld [vmem:[%s3] sm:$0xf]
      %v548 = vld [vmem:[%s3 + $0x4] sm:$0xf]
      %v549 = vld [vmem:[%s3 + $0x8] sm:$0xf]
      %v550 = vld [vmem:[%s3 + $0xc] sm:$0xf]
      %v551 = vld [vmem:[%s3 + $0x10] sm:$0xf]
      %v552 = vld [vmem:[%s3 + $0x14] sm:$0xf]
      %v553 = vld [vmem:[%s3 + $0x18] sm:$0xf]
      %v554 = vld [vmem:[%s3 + $0x1c] sm:$0xf]
      %v555 = vld [vmem:[%s6] sm:$0xff]
      %v556 = vld [vmem:[%s6 + $0x8] sm:$0xff]
      %v557 = vld [vmem:[%s6 + $0x10] sm:$0xff]
      %v558 = vld [vmem:[%s6 + $0x18] sm:$0xff]
      %v559 = vld [vmem:[%s6 + $0x20] sm:$0xff]
      %v560 = vld [vmem:[%s6 + $0x28] sm:$0xff]
      %v561 = vld [vmem:[%s6 + $0x30] sm:$0xff]
      %v562 = vld [vmem:[%s6 + $0x38] sm:$0xff]
      %564 = vset.pattern.permute.xlu0 0
      %565 = vperm.xlu0 %564, %v555
      %v566 = vpop.permute.xlu0 %565
      %569 = vset.pattern.permute.xlu0 0
      %570 = vperm.xlu0 %569, %v556
      %v571 = vpop.permute.xlu0 %570
      %574 = vset.pattern.permute.xlu0 0
      %575 = vperm.xlu0 %574, %v557
      %v576 = vpop.permute.xlu0 %575
      %579 = vset.pattern.permute.xlu0 0
      %580 = vperm.xlu0 %579, %v558
      %v581 = vpop.permute.xlu0 %580
      %584 = vset.pattern.permute.xlu0 0
      %585 = vperm.xlu0 %584, %v559
      %v586 = vpop.permute.xlu0 %585
      %589 = vset.pattern.permute.xlu0 0
      %590 = vperm.xlu0 %589, %v560
      %v591 = vpop.permute.xlu0 %590
      %594 = vset.pattern.permute.xlu0 0
      %595 = vperm.xlu0 %594, %v561
      %v596 = vpop.permute.xlu0 %595
      %599 = vset.pattern.permute.xlu0 0
      %600 = vperm.xlu0 %599, %v562
      %v601 = vpop.permute.xlu0 %600
      %v611 = vunpack.c.l.b16 %v547
      %v612 = vunpack.c.l.b16 %v548
      %v613 = vunpack.c.l.b16 %v549
      %v614 = vunpack.c.l.b16 %v550
      %v615 = vunpack.c.l.b16 %v551
      %v616 = vunpack.c.l.b16 %v552
      %v617 = vunpack.c.l.b16 %v553
      %v618 = vunpack.c.l.b16 %v554
      %v619 = vpack.c.b16 %v612, %v611
      %v620 = vpack.c.b16 %v614, %v613
      %v621 = vpack.c.b16 %v616, %v615
      %v622 = vpack.c.b16 %v618, %v617
      %v624 = vsel %vm451, %v619, 0
      %v627 = vsel %vm451, %v620, 0
      %v630 = vsel %vm451, %v621, 0
      %v633 = vsel %vm451, %v622, 0
      %635 = vmatprep.subr.bf16.mxu0 0
      %636 = vmatpush1.bf16.msra.mxu0 0
      %637 = vmatprep.subr.bf16.mxu0 0
      %638 = vmatpush1.bf16.msra.mxu0 0
      %639 = vmatprep.subr.bf16.mxu0 0
      %640 = vmatpush1.bf16.msra.mxu0 0
      %641 = vmatprep.subr.bf16.mxu0 0
      %642 = vmatpush1.bf16.msra.mxu0 0
      %643 = vmatprep.subr.bf16.mxu0 %v443
      %644 = vmatpush1.bf16.msra.mxu0 %v442
      %645 = vmatprep.subr.bf16.mxu0 %v441
      %646 = vmatpush1.bf16.msra.mxu0 %v440
      %647 = vmatprep.subr.bf16.mxu0 %v439
      %648 = vmatpush1.bf16.msra.mxu0 %v438
      %649 = vmatprep.subr.bf16.mxu0 %v437
      %650 = vmatpush1.bf16.msra.mxu0 %v436
      %651 = vmatprep.subr.bf16.mxu0 0
      %652 = vmatpush2.bf16.msra.mxu0 0
      %653 = vmatprep.subr.bf16.mxu0 0
      %654 = vmatpush2.bf16.msra.mxu0 0
      %655 = vmatprep.subr.bf16.mxu0 0
      %656 = vmatpush2.bf16.msra.mxu0 0
      %657 = vmatprep.subr.bf16.mxu0 0
      %658 = vmatpush2.bf16.msra.mxu0 0
      %659 = vmatprep.subr.bf16.mxu0 0
      %660 = vmatpush2.bf16.msra.mxu0 0
      %661 = vmatprep.subr.bf16.mxu0 0
      %662 = vmatpush2.bf16.msra.mxu0 0
      %663 = vmatprep.subr.bf16.mxu0 0
      %664 = vmatpush2.bf16.msra.mxu0 0
      %665 = vmatprep.subr.bf16.mxu0 0
      %666 = vmatpush2.bf16.msra.mxu0 0
      %667 = vmatprep.mubr.bf16.mxu0 0
      %668 = vmatmul.mubr.bf16.gmra.mxu0 %v624
      %v669 = vpop.f32.mrf.mxu0
      %v670 = vadd.f32 %v566, %v669
      %v671 = vpop.f32.mrf.mxu0
      %v672 = vadd.f32 %v566, %v671
      %v673 = vpop.f32.mrf.mxu0
      %v674 = vadd.f32 %v571, %v673
      %v675 = vpop.f32.mrf.mxu0
      %v676 = vadd.f32 %v571, %v675
      %677 = vmatprep.mubr.bf16.mxu0 0
      %678 = vmatmul.mubr.bf16.gmra.mxu0 %v627
      %v679 = vpop.f32.mrf.mxu0
      %v680 = vadd.f32 %v576, %v679
      %v681 = vpop.f32.mrf.mxu0
      %v682 = vadd.f32 %v576, %v681
      %v683 = vpop.f32.mrf.mxu0
      %v684 = vadd.f32 %v581, %v683
      %v685 = vpop.f32.mrf.mxu0
      %v686 = vadd.f32 %v581, %v685
      %687 = vmatprep.mubr.bf16.mxu0 0
      %688 = vmatmul.mubr.bf16.gmra.mxu0 %v630
      %v689 = vpop.f32.mrf.mxu0
      %v690 = vadd.f32 %v586, %v689
      %v691 = vpop.f32.mrf.mxu0
      %v692 = vadd.f32 %v586, %v691
      %v693 = vpop.f32.mrf.mxu0
      %v694 = vadd.f32 %v591, %v693
      %v695 = vpop.f32.mrf.mxu0
      %v696 = vadd.f32 %v591, %v695
      %697 = vmatprep.mubr.bf16.mxu0 0
      %698 = vmatmul.mubr.bf16.gmra.mxu0 %v633
      %v699 = vpop.f32.mrf.mxu0
      %v700 = vadd.f32 %v596, %v699
      %v701 = vpop.f32.mrf.mxu0
      %v702 = vadd.f32 %v596, %v701
      %v703 = vpop.f32.mrf.mxu0
      %v704 = vadd.f32 %v601, %v703
      %v705 = vpop.f32.mrf.mxu0
      %v706 = vadd.f32 %v601, %v705
      %707 = vdwg.mxu0
      %v708 = vpack.c.bf16 %v490, %v490
      %v709 = vpack.c.bf16 %v492, %v492
      %v712 = vunpack.c.l.b16 %v708
      %v713 = vunpack.c.l.b16 %v709
      %v714 = vpack.c.b16 %v713, %v712
      %716 = vst [vmem:[%s397] sm:$0xff] %v714
      %v717 = vpack.c.bf16 %v541, %v541
      %v718 = vpack.c.bf16 %v543, %v543
      %v721 = vunpack.c.l.b16 %v717
      %v722 = vunpack.c.l.b16 %v718
      %v723 = vpack.c.b16 %v722, %v721
      %725 = vst [vmem:[%s407] sm:$0xff] %v723
      %v726 = vpack.c.bf16 %v674, %v670
      %v727 = vpack.c.bf16 %v676, %v672
      %v728 = vpack.c.bf16 %v684, %v680
      %v729 = vpack.c.bf16 %v686, %v682
      %v730 = vpack.c.bf16 %v694, %v690
      %v731 = vpack.c.bf16 %v696, %v692
      %v732 = vpack.c.bf16 %v704, %v700
      %v733 = vpack.c.bf16 %v706, %v702
      %v742 = vunpack.c.l.b16 %v726
      %v743 = vunpack.c.l.b16 %v727
      %v744 = vunpack.c.h.b16 %v726
      %v745 = vunpack.c.h.b16 %v727
      %v746 = vunpack.c.l.b16 %v728
      %v747 = vunpack.c.l.b16 %v729
      %v748 = vunpack.c.h.b16 %v728
      %v749 = vunpack.c.h.b16 %v729
      %v750 = vunpack.c.l.b16 %v730
      %v751 = vunpack.c.l.b16 %v731
      %v752 = vunpack.c.h.b16 %v730
      %v753 = vunpack.c.h.b16 %v731
      %v754 = vunpack.c.l.b16 %v732
      %v755 = vunpack.c.l.b16 %v733
      %v756 = vunpack.c.h.b16 %v732
      %v757 = vunpack.c.h.b16 %v733
      %v758 = vpack.c.b16 %v743, %v742
      %v759 = vpack.c.b16 %v745, %v744
      %v760 = vpack.c.b16 %v747, %v746
      %v761 = vpack.c.b16 %v749, %v748
      %v762 = vpack.c.b16 %v751, %v750
      %v763 = vpack.c.b16 %v753, %v752
      %v764 = vpack.c.b16 %v755, %v754
      %v765 = vpack.c.b16 %v757, %v756
      %774 = vst [vmem:[%s417] sm:$0xff] %v758
      %775 = vst [vmem:[%s417 + $0x8] sm:$0xff] %v759
      %776 = vst [vmem:[%s417 + $0x10] sm:$0xff] %v760
      %777 = vst [vmem:[%s417 + $0x18] sm:$0xff] %v761
      %778 = vst [vmem:[%s417 + $0x20] sm:$0xff] %v762
      %779 = vst [vmem:[%s417 + $0x28] sm:$0xff] %v763
      %780 = vst [vmem:[%s417 + $0x30] sm:$0xff] %v764
      %781 = vst [vmem:[%s417 + $0x38] sm:$0xff] %v765
      %s782 = smul.u32 2, %s26
      %p783 = scmp.lt.s32.totalorder %s25, 1
      %s784 = scalar_select %p783, %s25, 1
      %p785 = scmp.lt.s32.totalorder %s782, 1
      %s786 = scalar_select %p785, %s782, 1
      %s787 = smul.addr %s784, 2
      %s788 = sadd.s32 %s786, %s787
      %s789 = smul.addr %s788, 4
      %s790 = scalar_lea.vmem %s7, %s789
      %s791 = smul.u32 2, %s26
      %p792 = scmp.lt.s32.totalorder %s25, 1
      %s793 = scalar_select %p792, %s25, 1
      %p794 = scmp.lt.s32.totalorder %s791, 1
      %s795 = scalar_select %p794, %s791, 1
      %s796 = smul.addr %s793, 2
      %s797 = sadd.s32 %s795, %s796
      %s798 = smul.addr %s797, 4
      %s799 = scalar_lea.vmem %s8, %s798
      %s800 = smul.u32 2, %s26
      %p801 = scmp.lt.s32.totalorder %s25, 1
      %s802 = scalar_select %p801, %s25, 1
      %p803 = scmp.lt.s32.totalorder %s800, 1
      %s804 = scalar_select %p803, %s800, 1
      %s805 = smul.addr %s802, 16
      %s806 = sadd.s32 %s804, %s805
      %s807 = smul.addr %s806, 4
      %s808 = scalar_lea.vmem %s9, %s807
      // Predicated region
      $region49: #{pam_forward.2} parent=47 // pred_check
        %p809 = pneg %p207
      $region50: #{pam_forward.2} parent=47 // pred_check_branch
        %811 = sbr.rel (%p809) target = $region52
      $region51: #{pam_forward.2} parent=47 // pred_region
        %s812 = smul.u32 2, %s26
      $region52: #{pam_forward.2} parent=47 // pred_fallthru
        _
      // Predicated region
      $region53: #{pam_forward.2} parent=47 // pred_check
        %p813 = pneg %p235
      $region54: #{pam_forward.2} parent=47 // pred_check_branch
        %815 = sbr.rel (%p813) target = $region56
      $region55: #{pam_forward.2} parent=47 // pred_region
        %s816 = smul.u32 2, %s26
      $region56: #{pam_forward.2} parent=47 // pred_fallthru
        _
      // Predicated region
      $region57: #{pam_forward.2} parent=47 // pred_check
        %p817 = pneg %p263
      $region58: #{pam_forward.2} parent=47 // pred_check_branch
        %819 = sbr.rel (%p817) target = $region60
      $region59: #{pam_forward.2} parent=47 // pred_region
        %s820 = smul.u32 2, %s26
      $region60: #{pam_forward.2} parent=47 // pred_fallthru
        _
    $region48: #{pam_forward.2} parent=5 // pred_fallthru
      _
    %p821 = scmp.le.s32.totalorder 2, %s16
    // Predicated region
    $region61: #{pam_forward.2} parent=5 // pred_check
      %p822 = pneg %p821
    $region62: #{pam_forward.2} parent=5 // pred_check_branch
      %824 = sbr.rel (%p822) target = $region64
    $region63: #{pam_forward.2} parent=5 // pred_region
      %s825 = ssub.s32 %s16, 2
      // Predicated region
      $region65: #{pam_forward.2} parent=63 // pred_check
        %p826 = pneg %p213
      $region66: #{pam_forward.2} parent=63 // pred_check_branch
        %828 = sbr.rel (%p826) target = $region68
      $region67: #{pam_forward.2} parent=63 // pred_region
        %s829 = smul.u32 2, %s28
        %p830 = scmp.lt.s32.totalorder %s27, 1
        %s831 = scalar_select %p830, %s27, 1
        %p832 = scmp.lt.s32.totalorder %s829, 1
        %s833 = scalar_select %p832, %s829, 1
        %s834 = smul.addr %s831, 2
        %s835 = sadd.s32 %s833, %s834
        %s836 = smul.addr %s835, 4
        %s837 = scalar_lea.vmem %s7, %s836
      $region68: #{pam_forward.2} parent=63 // pred_fallthru
        _
      // Predicated region
      $region69: #{pam_forward.2} parent=63 // pred_check
        %p838 = pneg %p241
      $region70: #{pam_forward.2} parent=63 // pred_check_branch
        %840 = sbr.rel (%p838) target = $region72
      $region71: #{pam_forward.2} parent=63 // pred_region
        %s841 = smul.u32 2, %s28
        %p842 = scmp.lt.s32.totalorder %s27, 1
        %s843 = scalar_select %p842, %s27, 1
        %p844 = scmp.lt.s32.totalorder %s841, 1
        %s845 = scalar_select %p844, %s841, 1
        %s846 = smul.addr %s843, 2
        %s847 = sadd.s32 %s845, %s846
        %s848 = smul.addr %s847, 4
        %s849 = scalar_lea.vmem %s8, %s848
      $region72: #{pam_forward.2} parent=63 // pred_fallthru
        _
      // Predicated region
      $region73: #{pam_forward.2} parent=63 // pred_check
        %p850 = pneg %p269
      $region74: #{pam_forward.2} parent=63 // pred_check_branch
        %852 = sbr.rel (%p850) target = $region76
      $region75: #{pam_forward.2} parent=63 // pred_region
        %s853 = smul.u32 2, %s28
        %p854 = scmp.lt.s32.totalorder %s27, 1
        %s855 = scalar_select %p854, %s27, 1
        %p856 = scmp.lt.s32.totalorder %s853, 1
        %s857 = scalar_select %p856, %s853, 1
        %s858 = smul.addr %s855, 16
        %s859 = sadd.s32 %s857, %s858
        %s860 = smul.addr %s859, 4
        %s861 = scalar_lea.vmem %s9, %s860
      $region76: #{pam_forward.2} parent=63 // pred_fallthru
        _
    $region64: #{pam_forward.2} parent=5 // pred_fallthru
      _
  $region6: #{pam_forward.2} parent=0 // loop_footer
    %s20 = sadd.s32 1, %s16
  $region7: #{pam_forward.2} parent=0 // loop_footer_branch
    %15 = sbr.rel target = $region3
  $region8: #{pam_forward.2} parent=0 // loop_exit
    _

</llo_original>
